<compile_context>
chip_gen: v7x
topology: tpu7x:2x2x1
jax: 0.10.0
libtpu: 0.0.40
codegen_flags: <defaults>
</compile_context>

<pallas_src>
import functools

import jax
import jax.numpy as jnp
import numpy as np
from jax.experimental import pallas as pl
from jax.experimental.pallas import tpu as pltpu

BN_EPS = 1e-5


# ------------------------------ fused kernel -------------------------------- #
def _build_fused_kernel(stage_dims, n_phase0, s_len, b_tile, c_offsets):
    """stage_dims: ((cin, cout), ...) per conv+BN+SiLU stage.
    n_phase0 = 2**n_stage (= ds_rate); s_len = L // ds_rate = output length."""
    n_stage = len(stage_dims)

    def kernel(*refs):
        x_ref = refs[0]                              # (b_tile, P0*C0, s_len) f32
        w_refs = refs[1:1 + n_stage]                 # (cout, 5*cin) bf16 each
        wh_ref = refs[1 + n_stage]                   # (E, c_last)  bf16
        bh_ref = refs[2 + n_stage]                   # (E, 1)       f32
        aff_ref = refs[3 + n_stage]                  # (2, C_total, 1) f32
        o_ref = refs[4 + n_stage]                    # (b_tile, E, s_len)
        e_bufs = refs[5 + n_stage:]                  # extended phase buffers

        cin0 = stage_dims[0][0]
        p0 = n_phase0

        # ---- build stage-0 extended (tap-unrolled) buffer from the input ------
        # E rows are grouped in blocks of cin rows; block r (= m + 2) holds the
        # input of phase (m mod p_in), time-shifted by (m div p_in), per sample
        # (sample b occupies lanes [b*s_len, (b+1)*s_len)).
        e0 = e_bufs[0]
        for b in range(b_tile):
            lo = b * s_len
            # main blocks: m = 0 .. p0-1
            e0[2 * cin0:(p0 + 2) * cin0, lo:lo + s_len] = x_ref[b, :, :]
            # front blocks: m = -2, -1  (phases p0-2, p0-1 shifted right by one)
            e0[0:2 * cin0, lo:lo + 1] = jnp.zeros((2 * cin0, 1), e0.dtype)
            e0[0:2 * cin0, lo + 1:lo + s_len] = (
                x_ref[b, (p0 - 2) * cin0:p0 * cin0, 0:s_len - 1])
            # tail block: m = p0  (phase 0 shifted left by one)
            e0[(p0 + 2) * cin0:(p0 + 3) * cin0, lo:lo + s_len - 1] = (
                x_ref[b, 0:cin0, 1:s_len])
            e0[(p0 + 2) * cin0:(p0 + 3) * cin0, lo + s_len - 1:lo + s_len] = (
                jnp.zeros((cin0, 1), e0.dtype))

        act = None
        for i, (cin, cout) in enumerate(stage_dims):
            p_in = n_phase0 >> i
            p_out = p_in // 2
            u = e_bufs[i]
            w = w_refs[i][...]                        # (cout, 5*cin) bf16
            off = c_offsets[i]
            scale = aff_ref[0, off:off + cout, :]     # (cout, 1) f32
            shift = aff_ref[1, off:off + cout, :]     # (cout, 1) f32
            is_last = (i + 1 == n_stage)

            for rp in range(p_out):
                # ONE MXU matmul per output phase: K = 5*cin, N = b_tile*s_len.
                lhs = u[2 * rp * cin:(2 * rp + 5) * cin, :].astype(jnp.bfloat16)
                y = jnp.dot(w, lhs, preferred_element_type=jnp.float32)
                y = y * scale + shift                 # folded conv-bias + BN
                y = y * jax.nn.sigmoid(y)             # SiLU (f32 epilogue)

                if is_last:
                    act = y                           # (cout, b_tile*s_len)
                else:
                    v = e_bufs[i + 1]
                    # main block of the next stage's extended buffer (full-lane)
                    v[(rp + 2) * cout:(rp + 3) * cout, :] = y
                    # boundary blocks (zero-padded per-sample time shifts)
                    for b in range(b_tile):
                        lo = b * s_len
                        if rp >= p_out - 2:           # front blocks: m = rp - p_out
                            r = rp - (p_out - 2)
                            v[r * cout:(r + 1) * cout, lo:lo + 1] = (
                                jnp.zeros((cout, 1), v.dtype))
                            v[r * cout:(r + 1) * cout, lo + 1:lo + s_len] = (
                                y[:, lo:lo + s_len - 1])
                        if rp == 0:                   # tail block: m = p_out
                            r = p_out + 2
                            v[r * cout:(r + 1) * cout, lo:lo + s_len - 1] = (
                                y[:, lo + 1:lo + s_len])
                            v[r * cout:(r + 1) * cout, lo + s_len - 1:lo + s_len] = (
                                jnp.zeros((cout, 1), v.dtype))

        # final Conv1d(chan, embed_dim, kernel_size=1) == channel matmul.
        # Output is channel-major (NCL) and lane-dense along time.
        out = jnp.dot(wh_ref[...], act.astype(jnp.bfloat16),
                      preferred_element_type=jnp.float32) + bh_ref[...]
        for b in range(b_tile):
            o_ref[b, :, :] = out[:, b * s_len:(b + 1) * s_len].astype(o_ref.dtype)

    return kernel


# --------------------------- parameter preparation -------------------------- #
def prepare_params(layer_params, head_w, head_b):
    """One-time fold (hoisted off the forward path): conv-bias + BN -> packed
    scale/shift; 5 conv taps concatenated into a single (cout, 5*cin) matrix."""
    w_cat, scales, shifts = [], [], []
    for p in layer_params:
        cout, cin, k = p["w"].shape
        assert k == 5
        w_cat.append(jnp.transpose(p["w"], (0, 2, 1)).reshape(cout, 5 * cin)
                     .astype(jnp.bfloat16))
        inv_std = 1.0 / jnp.sqrt(p["var"] + BN_EPS)
        scale = p["gamma"] * inv_std
        scales.append(scale)
        shifts.append((p["b"] - p["mean"]) * scale + p["beta"])
    affine = jnp.stack([jnp.concatenate(scales), jnp.concatenate(shifts)], axis=0)
    affine = affine[:, :, None].astype(jnp.float32)            # (2, C_total, 1)
    wh = head_w[:, :, 0].astype(jnp.bfloat16)                  # (E, c_last)
    bh = head_b.astype(jnp.float32)[:, None]                   # (E, 1)
    return tuple(w_cat), wh, bh, affine


# ------------------------------ forward wrapper ------------------------------ #
@functools.partial(jax.jit, static_argnames=("b_tile",))
def conv_down_sampler_forward(x_ncl, w_cat, wh, bh, affine, *, b_tile=1):
    n, cin0, length = x_ncl.shape
    n_stage = len(w_cat)
    n_phase0 = 2 ** n_stage                      # == ds_rate
    assert length % n_phase0 == 0, "input length must be divisible by ds_rate"
    assert n % b_tile == 0
    s_len = length // n_phase0
    assert s_len >= 2
    e_dim = wh.shape[0]

    stage_dims = []
    cin = cin0
    for w in w_cat:
        cout = w.shape[0]
        assert w.shape[1] == 5 * cin
        stage_dims.append((cin, cout))
        cin = cout
    assert cin == wh.shape[1]
    # the final stage must produce exactly one output phase (true when
    # ds_rate == 2**n_stage); guard against silently dropping phases.
    assert (n_phase0 >> (n_stage - 1)) // 2 == 1

    c_offsets, off = [], 0
    for (_, cout) in stage_dims:
        c_offsets.append(off)
        off += cout

    # (B, C, L) -> (B, P0*C, S): phase-major / channel-minor rows, time last.
    x_phased = jnp.transpose(
        x_ncl.astype(jnp.float32).reshape(n, cin0, s_len, n_phase0),
        (0, 3, 1, 2)).reshape(n, n_phase0 * cin0, s_len)

    kernel = _build_fused_kernel(tuple(stage_dims), n_phase0, s_len, b_tile,
                                 tuple(c_offsets))

    in_specs = [pl.BlockSpec((b_tile, n_phase0 * cin0, s_len),
                             lambda g: (g, 0, 0))]
    inputs = [x_phased]
    for w in w_cat:
        in_specs.append(pl.BlockSpec(w.shape, lambda g: (0, 0)))
        inputs.append(w)
    in_specs += [pl.BlockSpec(wh.shape, lambda g: (0, 0)),
                 pl.BlockSpec(bh.shape, lambda g: (0, 0)),
                 pl.BlockSpec(affine.shape, lambda g: (0, 0, 0))]
    inputs += [wh, bh, affine]

    # Extended (tap-unrolled) phase buffers: ((p_in + 3) * cin, b_tile * s_len).
    scratch_shapes = [
        pltpu.VMEM((((n_phase0 >> i) + 3) * stage_dims[i][0], b_tile * s_len),
                   jnp.float32)
        for i in range(n_stage)
    ]

    out_ncl = pl.pallas_call(
        kernel,
        out_shape=jax.ShapeDtypeStruct((n, e_dim, s_len), jnp.float32),
        grid=(n // b_tile,),
        in_specs=in_specs,
        out_specs=pl.BlockSpec((b_tile, e_dim, s_len), lambda g: (g, 0, 0)),
        scratch_shapes=scratch_shapes,
        compiler_params=pltpu.CompilerParams(
            dimension_semantics=("parallel",)),
    )(*inputs)
    return out_ncl                               # already NCL: no transpose


# ----------------------------- pure-JAX reference ---------------------------- #
def reference_forward(x_ncl, layer_params, head_w, head_b):
    x = x_ncl.astype(jnp.float32)
    for p in layer_params:
        y = jax.lax.conv_general_dilated(
            x, p["w"], window_strides=(2,), padding=[(2, 2)],
            dimension_numbers=("NCH", "OIH", "NCH"),
            precision=jax.lax.Precision.HIGHEST,
        ) + p["b"][None, :, None]
        y = (p["gamma"][None, :, None]
             * (y - p["mean"][None, :, None])
             / jnp.sqrt(p["var"][None, :, None] + BN_EPS)
             + p["beta"][None, :, None])
        x = y * jax.nn.sigmoid(y)
    y = jax.lax.conv_general_dilated(
        x, head_w, window_strides=(1,), padding=[(0, 0)],
        dimension_numbers=("NCH", "OIH", "NCH"),
        precision=jax.lax.Precision.HIGHEST,
    ) + head_b[None, :, None]
    return y


# --------------------------------- parameters -------------------------------- #
def init_params(key, in_chans, embed_dim, ds_rate=16):
    ds = ds_rate // 2
    chan = embed_dim // ds
    specs = [(in_chans, chan)]
    cout = chan
    while ds > 1:
        specs.append((cout, 2 * cout))
        ds //= 2
        cout *= 2
    assert cout == embed_dim
    layers = []
    for (ci, co) in specs:
        key, k1, k2, k3, k4, k5, k6 = jax.random.split(key, 7)
        layers.append(dict(
            w=jax.random.normal(k1, (co, ci, 5), jnp.float32) / np.sqrt(5 * ci),
            b=0.05 * jax.random.normal(k2, (co,), jnp.float32),
            gamma=1.0 + 0.1 * jax.random.normal(k3, (co,), jnp.float32),
            beta=0.1 * jax.random.normal(k4, (co,), jnp.float32),
            mean=0.1 * jax.random.normal(k5, (co,), jnp.float32),
            var=1.0 + 0.1 * jax.random.uniform(k6, (co,), jnp.float32),
        ))
    key, k1, k2 = jax.random.split(key, 3)
    head_w = jax.random.normal(k1, (embed_dim, cout, 1), jnp.float32) / np.sqrt(cout)
    head_b = 0.05 * jax.random.normal(k2, (embed_dim,), jnp.float32)
    return layers, head_w, head_b


# ------------------------------------ main ------------------------------------ #
if __name__ == "__main__":
    key = jax.random.PRNGKey(0)
    in_chans, embed_dim, ds_rate = 2, 32, 16
    batch, length = 8, 128      # IQ data: 2 channels, length divisible by ds_rate
    b_tile = 2                  # grid = 4 steps -> >= 2 steps per TC on dual-core parts

    kp, kx = jax.random.split(key)
    layer_params, head_w, head_b = init_params(kp, in_chans, embed_dim, ds_rate)
    x = jax.random.normal(kx, (batch, in_chans, length), jnp.float32)

    # one-time parameter folding (off the per-call critical path)
    w_cat, wh, bh, affine = prepare_params(layer_params, head_w, head_b)

    out = conv_down_sampler_forward(x, w_cat, wh, bh, affine, b_tile=b_tile)
    out = jax.block_until_ready(out)

    ref = jax.block_until_ready(reference_forward(x, layer_params, head_w, head_b))
    assert out.shape == (batch, embed_dim, length // ds_rate), out.shape
    # bf16 MXU operands (f32 accumulation) -> looser tolerance than pure f32.
    np.testing.assert_allclose(np.asarray(out), np.asarray(ref), rtol=5e-2, atol=5e-2)

    print("KERNEL_OK")
</pallas_src>

<mosaic_0001>
module attributes {stable_mosaic.version = 11 : i64} {
  func.func @kernel(%arg0: i32, %arg1: memref<2x32x8xf32, #tpu.memory_space<vmem>>, %arg2: memref<4x10xbf16, #tpu.memory_space<vmem>>, %arg3: memref<8x20xbf16, #tpu.memory_space<vmem>>, %arg4: memref<16x40xbf16, #tpu.memory_space<vmem>>, %arg5: memref<32x80xbf16, #tpu.memory_space<vmem>>, %arg6: memref<32x32xbf16, #tpu.memory_space<vmem>>, %arg7: memref<32x1xf32, #tpu.memory_space<vmem>>, %arg8: memref<2x60x1xf32, #tpu.memory_space<vmem>>, %arg9: memref<2x32x8xf32, #tpu.memory_space<vmem>>, %arg10: memref<38x16xf32, #tpu.memory_space<vmem>>, %arg11: memref<44x16xf32, #tpu.memory_space<vmem>>, %arg12: memref<56x16xf32, #tpu.memory_space<vmem>>, %arg13: memref<80x16xf32, #tpu.memory_space<vmem>>) attributes {dimension_semantics = [#tpu.dimension_semantics<parallel>], iteration_bounds = array<i64: 4>, scalar_prefetch = 0 : i64, scratch_operands = 4 : i64, tpu.core_type = #tpu.core_type<tc>, window_params = [{transform_indices = @transform_0, window_bounds = array<i64: 2, 32, 8>}, {pipeline_mode = #tpu.pipeline_mode<synchronous>, transform_indices = @transform_1, window_bounds = array<i64: 4, 10>}, {pipeline_mode = #tpu.pipeline_mode<synchronous>, transform_indices = @transform_2, window_bounds = array<i64: 8, 20>}, {pipeline_mode = #tpu.pipeline_mode<synchronous>, transform_indices = @transform_3, window_bounds = array<i64: 16, 40>}, {pipeline_mode = #tpu.pipeline_mode<synchronous>, transform_indices = @transform_4, window_bounds = array<i64: 32, 80>}, {pipeline_mode = #tpu.pipeline_mode<synchronous>, transform_indices = @transform_5, window_bounds = array<i64: 32, 32>}, {pipeline_mode = #tpu.pipeline_mode<synchronous>, transform_indices = @transform_6, window_bounds = array<i64: 32, 1>}, {pipeline_mode = #tpu.pipeline_mode<synchronous>, transform_indices = @transform_7, window_bounds = array<i64: 2, 60, 1>}, {transform_indices = @transform_8, window_bounds = array<i64: 2, 32, 8>}]} {
    %c0 = arith.constant 0 : index
    %c0_0 = arith.constant 0 : index
    %c0_1 = arith.constant 0 : index
    %0 = vector.load %arg1[%c0, %c0_0, %c0_1] : memref<2x32x8xf32, #tpu.memory_space<vmem>>, vector<1x32x8xf32>
    %1 = vector.shape_cast %0 : vector<1x32x8xf32> to vector<32x8xf32>
    %c4 = arith.constant 4 : index
    %c0_2 = arith.constant 0 : index
    %2 = vector.load %arg10[%c4, %c0_2] : memref<38x16xf32, #tpu.memory_space<vmem>>, vector<32x8xf32>
    tpu.vector_store %arg10[%c4, %c0_2], %1 {strides = array<i32>} : memref<38x16xf32, #tpu.memory_space<vmem>>, vector<32x8xf32>,
    %cst = arith.constant 0.000000e+00 : f32
    %3 = vector.broadcast %cst : f32 to vector<4x1xf32>
    %c0_3 = arith.constant 0 : index
    %c0_4 = arith.constant 0 : index
    %4 = vector.load %arg10[%c0_3, %c0_4] : memref<38x16xf32, #tpu.memory_space<vmem>>, vector<4x1xf32>
    tpu.vector_store %arg10[%c0_3, %c0_4], %3 {strides = array<i32>} : memref<38x16xf32, #tpu.memory_space<vmem>>, vector<4x1xf32>,
    %c0_5 = arith.constant 0 : index
    %c28 = arith.constant 28 : index
    %c0_6 = arith.constant 0 : index
    %5 = vector.load %arg1[%c0_5, %c28, %c0_6] : memref<2x32x8xf32, #tpu.memory_space<vmem>>, vector<1x4x7xf32>
    %6 = vector.shape_cast %5 : vector<1x4x7xf32> to vector<4x7xf32>
    %c0_7 = arith.constant 0 : index
    %c1 = arith.constant 1 : index
    %7 = vector.load %arg10[%c0_7, %c1] : memref<38x16xf32, #tpu.memory_space<vmem>>, vector<4x7xf32>
    tpu.vector_store %arg10[%c0_7, %c1], %6 {strides = array<i32>} : memref<38x16xf32, #tpu.memory_space<vmem>>, vector<4x7xf32>,
    %c0_8 = arith.constant 0 : index
    %c0_9 = arith.constant 0 : index
    %c1_10 = arith.constant 1 : index
    %8 = vector.load %arg1[%c0_8, %c0_9, %c1_10] : memref<2x32x8xf32, #tpu.memory_space<vmem>>, vector<1x2x7xf32>
    %9 = vector.shape_cast %8 : vector<1x2x7xf32> to vector<2x7xf32>
    %c36 = arith.constant 36 : index
    %c0_11 = arith.constant 0 : index
    %10 = vector.load %arg10[%c36, %c0_11] : memref<38x16xf32, #tpu.memory_space<vmem>>, vector<2x7xf32>
    tpu.vector_store %arg10[%c36, %c0_11], %9 {strides = array<i32>} : memref<38x16xf32, #tpu.memory_space<vmem>>, vector<2x7xf32>,
    %cst_12 = arith.constant 0.000000e+00 : f32
    %11 = vector.broadcast %cst_12 : f32 to vector<2x1xf32>
    %c36_13 = arith.constant 36 : index
    %c7 = arith.constant 7 : index
    %12 = vector.load %arg10[%c36_13, %c7] : memref<38x16xf32, #tpu.memory_space<vmem>>, vector<2x1xf32>
    tpu.vector_store %arg10[%c36_13, %c7], %11 {strides = array<i32>} : memref<38x16xf32, #tpu.memory_space<vmem>>, vector<2x1xf32>,
    %c1_14 = arith.constant 1 : index
    %c0_15 = arith.constant 0 : index
    %c0_16 = arith.constant 0 : index
    %13 = vector.load %arg1[%c1_14, %c0_15, %c0_16] : memref<2x32x8xf32, #tpu.memory_space<vmem>>, vector<1x32x8xf32>
    %14 = vector.shape_cast %13 : vector<1x32x8xf32> to vector<32x8xf32>
    %c4_17 = arith.constant 4 : index
    %c8 = arith.constant 8 : index
    %15 = vector.load %arg10[%c4_17, %c8] : memref<38x16xf32, #tpu.memory_space<vmem>>, vector<32x8xf32>
    tpu.vector_store %arg10[%c4_17, %c8], %14 {strides = array<i32>} : memref<38x16xf32, #tpu.memory_space<vmem>>, vector<32x8xf32>,
    %cst_18 = arith.constant 0.000000e+00 : f32
    %16 = vector.broadcast %cst_18 : f32 to vector<4x1xf32>
    %c0_19 = arith.constant 0 : index
    %c8_20 = arith.constant 8 : index
    %17 = vector.load %arg10[%c0_19, %c8_20] : memref<38x16xf32, #tpu.memory_space<vmem>>, vector<4x1xf32>
    tpu.vector_store %arg10[%c0_19, %c8_20], %16 {strides = array<i32>} : memref<38x16xf32, #tpu.memory_space<vmem>>, vector<4x1xf32>,
    %c1_21 = arith.constant 1 : index
    %c28_22 = arith.constant 28 : index
    %c0_23 = arith.constant 0 : index
    %18 = vector.load %arg1[%c1_21, %c28_22, %c0_23] : memref<2x32x8xf32, #tpu.memory_space<vmem>>, vector<1x4x7xf32>
    %19 = vector.shape_cast %18 : vector<1x4x7xf32> to vector<4x7xf32>
    %c0_24 = arith.constant 0 : index
    %c9 = arith.constant 9 : index
    %20 = vector.load %arg10[%c0_24, %c9] : memref<38x16xf32, #tpu.memory_space<vmem>>, vector<4x7xf32>
    tpu.vector_store %arg10[%c0_24, %c9], %19 {strides = array<i32>} : memref<38x16xf32, #tpu.memory_space<vmem>>, vector<4x7xf32>,
    %c1_25 = arith.constant 1 : index
    %c0_26 = arith.constant 0 : index
    %c1_27 = arith.constant 1 : index
    %21 = vector.load %arg1[%c1_25, %c0_26, %c1_27] : memref<2x32x8xf32, #tpu.memory_space<vmem>>, vector<1x2x7xf32>
    %22 = vector.shape_cast %21 : vector<1x2x7xf32> to vector<2x7xf32>
    %c36_28 = arith.constant 36 : index
    %c8_29 = arith.constant 8 : index
    %23 = vector.load %arg10[%c36_28, %c8_29] : memref<38x16xf32, #tpu.memory_space<vmem>>, vector<2x7xf32>
    tpu.vector_store %arg10[%c36_28, %c8_29], %22 {strides = array<i32>} : memref<38x16xf32, #tpu.memory_space<vmem>>, vector<2x7xf32>,
    %cst_30 = arith.constant 0.000000e+00 : f32
    %24 = vector.broadcast %cst_30 : f32 to vector<2x1xf32>
    %c36_31 = arith.constant 36 : index
    %c15 = arith.constant 15 : index
    %25 = vector.load %arg10[%c36_31, %c15] : memref<38x16xf32, #tpu.memory_space<vmem>>, vector<2x1xf32>
    tpu.vector_store %arg10[%c36_31, %c15], %24 {strides = array<i32>} : memref<38x16xf32, #tpu.memory_space<vmem>>, vector<2x1xf32>,
    %c0_32 = arith.constant 0 : index
    %c0_33 = arith.constant 0 : index
    %26 = vector.load %arg2[%c0_32, %c0_33] : memref<4x10xbf16, #tpu.memory_space<vmem>>, vector<4x10xbf16>
    %c0_34 = arith.constant 0 : index
    %c0_35 = arith.constant 0 : index
    %c0_36 = arith.constant 0 : index
    %27 = vector.load %arg8[%c0_34, %c0_35, %c0_36] : memref<2x60x1xf32, #tpu.memory_space<vmem>>, vector<1x4x1xf32>
    %28 = vector.shape_cast %27 : vector<1x4x1xf32> to vector<4x1xf32>
    %c1_37 = arith.constant 1 : index
    %c0_38 = arith.constant 0 : index
    %c0_39 = arith.constant 0 : index
    %29 = vector.load %arg8[%c1_37, %c0_38, %c0_39] : memref<2x60x1xf32, #tpu.memory_space<vmem>>, vector<1x4x1xf32>
    %30 = vector.shape_cast %29 : vector<1x4x1xf32> to vector<4x1xf32>
    %c0_40 = arith.constant 0 : index
    %c0_41 = arith.constant 0 : index
    %31 = vector.load %arg10[%c0_40, %c0_41] : memref<38x16xf32, #tpu.memory_space<vmem>>, vector<10x16xf32>
    %32 = arith.truncf %31 : vector<10x16xf32> to vector<10x16xbf16>
    %cst_42 = arith.constant dense<0.000000e+00> : vector<4x16xf32>
    %33 = tpu.matmul %26, %32, %cst_42 {dimension_numbers = #tpu.dot_dimension_numbers<[1], [0], [0], [1], [0, 0, 1, 1], [], []>} : vector<4x10xbf16>, vector<10x16xbf16>, vector<4x16xf32> -> vector<4x16xf32>
    %34 = vector.broadcast %28 : vector<4x1xf32> to vector<4x16xf32>
    %35 = arith.mulf %33, %34 : vector<4x16xf32>
    %36 = vector.broadcast %30 : vector<4x1xf32> to vector<4x16xf32>
    %37 = arith.addf %35, %36 : vector<4x16xf32>
    %38 = arith.negf %37 : vector<4x16xf32>
    %39 = math.exp %38 : vector<4x16xf32>
    %cst_43 = arith.constant 1.000000e+00 : f32
    %40 = vector.broadcast %cst_43 : f32 to vector<4x16xf32>
    %41 = arith.addf %40, %39 : vector<4x16xf32>
    %42 = arith.divf %40, %41 : vector<4x16xf32>
    %43 = arith.mulf %37, %42 : vector<4x16xf32>
    %c8_44 = arith.constant 8 : index
    %c0_45 = arith.constant 0 : index
    %44 = vector.load %arg11[%c8_44, %c0_45] : memref<44x16xf32, #tpu.memory_space<vmem>>, vector<4x16xf32>
    tpu.vector_store %arg11[%c8_44, %c0_45], %43 {strides = array<i32>} : memref<44x16xf32, #tpu.memory_space<vmem>>, vector<4x16xf32>,
    %45 = vector.extract_strided_slice %43 {offsets = [0, 1], sizes = [4, 7], strides = [1, 1]} : vector<4x16xf32> to vector<4x7xf32>
    %c40 = arith.constant 40 : index
    %c0_46 = arith.constant 0 : index
    %46 = vector.load %arg11[%c40, %c0_46] : memref<44x16xf32, #tpu.memory_space<vmem>>, vector<4x7xf32>
    tpu.vector_store %arg11[%c40, %c0_46], %45 {strides = array<i32>} : memref<44x16xf32, #tpu.memory_space<vmem>>, vector<4x7xf32>,
    %cst_47 = arith.constant 0.000000e+00 : f32
    %47 = vector.broadcast %cst_47 : f32 to vector<4x1xf32>
    %c40_48 = arith.constant 40 : index
    %c7_49 = arith.constant 7 : index
    %48 = vector.load %arg11[%c40_48, %c7_49] : memref<44x16xf32, #tpu.memory_space<vmem>>, vector<4x1xf32>
    tpu.vector_store %arg11[%c40_48, %c7_49], %47 {strides = array<i32>} : memref<44x16xf32, #tpu.memory_space<vmem>>, vector<4x1xf32>,
    %49 = vector.extract_strided_slice %43 {offsets = [0, 9], sizes = [4, 7], strides = [1, 1]} : vector<4x16xf32> to vector<4x7xf32>
    %c40_50 = arith.constant 40 : index
    %c8_51 = arith.constant 8 : index
    %50 = vector.load %arg11[%c40_50, %c8_51] : memref<44x16xf32, #tpu.memory_space<vmem>>, vector<4x7xf32>
    tpu.vector_store %arg11[%c40_50, %c8_51], %49 {strides = array<i32>} : memref<44x16xf32, #tpu.memory_space<vmem>>, vector<4x7xf32>,
    %cst_52 = arith.constant 0.000000e+00 : f32
    %51 = vector.broadcast %cst_52 : f32 to vector<4x1xf32>
    %c40_53 = arith.constant 40 : index
    %c15_54 = arith.constant 15 : index
    %52 = vector.load %arg11[%c40_53, %c15_54] : memref<44x16xf32, #tpu.memory_space<vmem>>, vector<4x1xf32>
    tpu.vector_store %arg11[%c40_53, %c15_54], %51 {strides = array<i32>} : memref<44x16xf32, #tpu.memory_space<vmem>>, vector<4x1xf32>,
    %c4_55 = arith.constant 4 : index
    %c0_56 = arith.constant 0 : index
    %53 = vector.load %arg10[%c4_55, %c0_56] : memref<38x16xf32, #tpu.memory_space<vmem>>, vector<10x16xf32>
    %54 = arith.truncf %53 : vector<10x16xf32> to vector<10x16xbf16>
    %cst_57 = arith.constant dense<0.000000e+00> : vector<4x16xf32>
    %55 = tpu.matmul %26, %54, %cst_57 {dimension_numbers = #tpu.dot_dimension_numbers<[1], [0], [0], [1], [0, 0, 1, 1], [], []>} : vector<4x10xbf16>, vector<10x16xbf16>, vector<4x16xf32> -> vector<4x16xf32>
    %56 = vector.broadcast %28 : vector<4x1xf32> to vector<4x16xf32>
    %57 = arith.mulf %55, %56 : vector<4x16xf32>
    %58 = vector.broadcast %30 : vector<4x1xf32> to vector<4x16xf32>
    %59 = arith.addf %57, %58 : vector<4x16xf32>
    %60 = arith.negf %59 : vector<4x16xf32>
    %61 = math.exp %60 : vector<4x16xf32>
    %cst_58 = arith.constant 1.000000e+00 : f32
    %62 = vector.broadcast %cst_58 : f32 to vector<4x16xf32>
    %63 = arith.addf %62, %61 : vector<4x16xf32>
    %64 = arith.divf %62, %63 : vector<4x16xf32>
    %65 = arith.mulf %59, %64 : vector<4x16xf32>
    %c12 = arith.constant 12 : index
    %c0_59 = arith.constant 0 : index
    %66 = vector.load %arg11[%c12, %c0_59] : memref<44x16xf32, #tpu.memory_space<vmem>>, vector<4x16xf32>
    tpu.vector_store %arg11[%c12, %c0_59], %65 {strides = array<i32>} : memref<44x16xf32, #tpu.memory_space<vmem>>, vector<4x16xf32>,
    %c8_60 = arith.constant 8 : index
    %c0_61 = arith.constant 0 : index
    %67 = vector.load %arg10[%c8_60, %c0_61] : memref<38x16xf32, #tpu.memory_space<vmem>>, vector<10x16xf32>
    %68 = arith.truncf %67 : vector<10x16xf32> to vector<10x16xbf16>
    %cst_62 = arith.constant dense<0.000000e+00> : vector<4x16xf32>
    %69 = tpu.matmul %26, %68, %cst_62 {dimension_numbers = #tpu.dot_dimension_numbers<[1], [0], [0], [1], [0, 0, 1, 1], [], []>} : vector<4x10xbf16>, vector<10x16xbf16>, vector<4x16xf32> -> vector<4x16xf32>
    %70 = vector.broadcast %28 : vector<4x1xf32> to vector<4x16xf32>
    %71 = arith.mulf %69, %70 : vector<4x16xf32>
    %72 = vector.broadcast %30 : vector<4x1xf32> to vector<4x16xf32>
    %73 = arith.addf %71, %72 : vector<4x16xf32>
    %74 = arith.negf %73 : vector<4x16xf32>
    %75 = math.exp %74 : vector<4x16xf32>
    %cst_63 = arith.constant 1.000000e+00 : f32
    %76 = vector.broadcast %cst_63 : f32 to vector<4x16xf32>
    %77 = arith.addf %76, %75 : vector<4x16xf32>
    %78 = arith.divf %76, %77 : vector<4x16xf32>
    %79 = arith.mulf %73, %78 : vector<4x16xf32>
    %c16 = arith.constant 16 : index
    %c0_64 = arith.constant 0 : index
    %80 = vector.load %arg11[%c16, %c0_64] : memref<44x16xf32, #tpu.memory_space<vmem>>, vector<4x16xf32>
    tpu.vector_store %arg11[%c16, %c0_64], %79 {strides = array<i32>} : memref<44x16xf32, #tpu.memory_space<vmem>>, vector<4x16xf32>,
    %c12_65 = arith.constant 12 : index
    %c0_66 = arith.constant 0 : index
    %81 = vector.load %arg10[%c12_65, %c0_66] : memref<38x16xf32, #tpu.memory_space<vmem>>, vector<10x16xf32>
    %82 = arith.truncf %81 : vector<10x16xf32> to vector<10x16xbf16>
    %cst_67 = arith.constant dense<0.000000e+00> : vector<4x16xf32>
    %83 = tpu.matmul %26, %82, %cst_67 {dimension_numbers = #tpu.dot_dimension_numbers<[1], [0], [0], [1], [0, 0, 1, 1], [], []>} : vector<4x10xbf16>, vector<10x16xbf16>, vector<4x16xf32> -> vector<4x16xf32>
    %84 = vector.broadcast %28 : vector<4x1xf32> to vector<4x16xf32>
    %85 = arith.mulf %83, %84 : vector<4x16xf32>
    %86 = vector.broadcast %30 : vector<4x1xf32> to vector<4x16xf32>
    %87 = arith.addf %85, %86 : vector<4x16xf32>
    %88 = arith.negf %87 : vector<4x16xf32>
    %89 = math.exp %88 : vector<4x16xf32>
    %cst_68 = arith.constant 1.000000e+00 : f32
    %90 = vector.broadcast %cst_68 : f32 to vector<4x16xf32>
    %91 = arith.addf %90, %89 : vector<4x16xf32>
    %92 = arith.divf %90, %91 : vector<4x16xf32>
    %93 = arith.mulf %87, %92 : vector<4x16xf32>
    %c20 = arith.constant 20 : index
    %c0_69 = arith.constant 0 : index
    %94 = vector.load %arg11[%c20, %c0_69] : memref<44x16xf32, #tpu.memory_space<vmem>>, vector<4x16xf32>
    tpu.vector_store %arg11[%c20, %c0_69], %93 {strides = array<i32>} : memref<44x16xf32, #tpu.memory_space<vmem>>, vector<4x16xf32>,
    %c16_70 = arith.constant 16 : index
    %c0_71 = arith.constant 0 : index
    %95 = vector.load %arg10[%c16_70, %c0_71] : memref<38x16xf32, #tpu.memory_space<vmem>>, vector<10x16xf32>
    %96 = arith.truncf %95 : vector<10x16xf32> to vector<10x16xbf16>
    %cst_72 = arith.constant dense<0.000000e+00> : vector<4x16xf32>
    %97 = tpu.matmul %26, %96, %cst_72 {dimension_numbers = #tpu.dot_dimension_numbers<[1], [0], [0], [1], [0, 0, 1, 1], [], []>} : vector<4x10xbf16>, vector<10x16xbf16>, vector<4x16xf32> -> vector<4x16xf32>
    %98 = vector.broadcast %28 : vector<4x1xf32> to vector<4x16xf32>
    %99 = arith.mulf %97, %98 : vector<4x16xf32>
    %100 = vector.broadcast %30 : vector<4x1xf32> to vector<4x16xf32>
    %101 = arith.addf %99, %100 : vector<4x16xf32>
    %102 = arith.negf %101 : vector<4x16xf32>
    %103 = math.exp %102 : vector<4x16xf32>
    %cst_73 = arith.constant 1.000000e+00 : f32
    %104 = vector.broadcast %cst_73 : f32 to vector<4x16xf32>
    %105 = arith.addf %104, %103 : vector<4x16xf32>
    %106 = arith.divf %104, %105 : vector<4x16xf32>
    %107 = arith.mulf %101, %106 : vector<4x16xf32>
    %c24 = arith.constant 24 : index
    %c0_74 = arith.constant 0 : index
    %108 = vector.load %arg11[%c24, %c0_74] : memref<44x16xf32, #tpu.memory_space<vmem>>, vector<4x16xf32>
    tpu.vector_store %arg11[%c24, %c0_74], %107 {strides = array<i32>} : memref<44x16xf32, #tpu.memory_space<vmem>>, vector<4x16xf32>,
    %c20_75 = arith.constant 20 : index
    %c0_76 = arith.constant 0 : index
    %109 = vector.load %arg10[%c20_75, %c0_76] : memref<38x16xf32, #tpu.memory_space<vmem>>, vector<10x16xf32>
    %110 = arith.truncf %109 : vector<10x16xf32> to vector<10x16xbf16>
    %cst_77 = arith.constant dense<0.000000e+00> : vector<4x16xf32>
    %111 = tpu.matmul %26, %110, %cst_77 {dimension_numbers = #tpu.dot_dimension_numbers<[1], [0], [0], [1], [0, 0, 1, 1], [], []>} : vector<4x10xbf16>, vector<10x16xbf16>, vector<4x16xf32> -> vector<4x16xf32>
    %112 = vector.broadcast %28 : vector<4x1xf32> to vector<4x16xf32>
    %113 = arith.mulf %111, %112 : vector<4x16xf32>
    %114 = vector.broadcast %30 : vector<4x1xf32> to vector<4x16xf32>
    %115 = arith.addf %113, %114 : vector<4x16xf32>
    %116 = arith.negf %115 : vector<4x16xf32>
    %117 = math.exp %116 : vector<4x16xf32>
    %cst_78 = arith.constant 1.000000e+00 : f32
    %118 = vector.broadcast %cst_78 : f32 to vector<4x16xf32>
    %119 = arith.addf %118, %117 : vector<4x16xf32>
    %120 = arith.divf %118, %119 : vector<4x16xf32>
    %121 = arith.mulf %115, %120 : vector<4x16xf32>
    %c28_79 = arith.constant 28 : index
    %c0_80 = arith.constant 0 : index
    %122 = vector.load %arg11[%c28_79, %c0_80] : memref<44x16xf32, #tpu.memory_space<vmem>>, vector<4x16xf32>
    tpu.vector_store %arg11[%c28_79, %c0_80], %121 {strides = array<i32>} : memref<44x16xf32, #tpu.memory_space<vmem>>, vector<4x16xf32>,
    %c24_81 = arith.constant 24 : index
    %c0_82 = arith.constant 0 : index
    %123 = vector.load %arg10[%c24_81, %c0_82] : memref<38x16xf32, #tpu.memory_space<vmem>>, vector<10x16xf32>
    %124 = arith.truncf %123 : vector<10x16xf32> to vector<10x16xbf16>
    %cst_83 = arith.constant dense<0.000000e+00> : vector<4x16xf32>
    %125 = tpu.matmul %26, %124, %cst_83 {dimension_numbers = #tpu.dot_dimension_numbers<[1], [0], [0], [1], [0, 0, 1, 1], [], []>} : vector<4x10xbf16>, vector<10x16xbf16>, vector<4x16xf32> -> vector<4x16xf32>
    %126 = vector.broadcast %28 : vector<4x1xf32> to vector<4x16xf32>
    %127 = arith.mulf %125, %126 : vector<4x16xf32>
    %128 = vector.broadcast %30 : vector<4x1xf32> to vector<4x16xf32>
    %129 = arith.addf %127, %128 : vector<4x16xf32>
    %130 = arith.negf %129 : vector<4x16xf32>
    %131 = math.exp %130 : vector<4x16xf32>
    %cst_84 = arith.constant 1.000000e+00 : f32
    %132 = vector.broadcast %cst_84 : f32 to vector<4x16xf32>
    %133 = arith.addf %132, %131 : vector<4x16xf32>
    %134 = arith.divf %132, %133 : vector<4x16xf32>
    %135 = arith.mulf %129, %134 : vector<4x16xf32>
    %c32 = arith.constant 32 : index
    %c0_85 = arith.constant 0 : index
    %136 = vector.load %arg11[%c32, %c0_85] : memref<44x16xf32, #tpu.memory_space<vmem>>, vector<4x16xf32>
    tpu.vector_store %arg11[%c32, %c0_85], %135 {strides = array<i32>} : memref<44x16xf32, #tpu.memory_space<vmem>>, vector<4x16xf32>,
    %cst_86 = arith.constant 0.000000e+00 : f32
    %137 = vector.broadcast %cst_86 : f32 to vector<4x1xf32>
    %c0_87 = arith.constant 0 : index
    %c0_88 = arith.constant 0 : index
    %138 = vector.load %arg11[%c0_87, %c0_88] : memref<44x16xf32, #tpu.memory_space<vmem>>, vector<4x1xf32>
    tpu.vector_store %arg11[%c0_87, %c0_88], %137 {strides = array<i32>} : memref<44x16xf32, #tpu.memory_space<vmem>>, vector<4x1xf32>,
    %139 = vector.extract_strided_slice %135 {offsets = [0, 0], sizes = [4, 7], strides = [1, 1]} : vector<4x16xf32> to vector<4x7xf32>
    %c0_89 = arith.constant 0 : index
    %c1_90 = arith.constant 1 : index
    %140 = vector.load %arg11[%c0_89, %c1_90] : memref<44x16xf32, #tpu.memory_space<vmem>>, vector<4x7xf32>
    tpu.vector_store %arg11[%c0_89, %c1_90], %139 {strides = array<i32>} : memref<44x16xf32, #tpu.memory_space<vmem>>, vector<4x7xf32>,
    %cst_91 = arith.constant 0.000000e+00 : f32
    %141 = vector.broadcast %cst_91 : f32 to vector<4x1xf32>
    %c0_92 = arith.constant 0 : index
    %c8_93 = arith.constant 8 : index
    %142 = vector.load %arg11[%c0_92, %c8_93] : memref<44x16xf32, #tpu.memory_space<vmem>>, vector<4x1xf32>
    tpu.vector_store %arg11[%c0_92, %c8_93], %141 {strides = array<i32>} : memref<44x16xf32, #tpu.memory_space<vmem>>, vector<4x1xf32>,
    %143 = vector.extract_strided_slice %135 {offsets = [0, 8], sizes = [4, 7], strides = [1, 1]} : vector<4x16xf32> to vector<4x7xf32>
    %c0_94 = arith.constant 0 : index
    %c9_95 = arith.constant 9 : index
    %144 = vector.load %arg11[%c0_94, %c9_95] : memref<44x16xf32, #tpu.memory_space<vmem>>, vector<4x7xf32>
    tpu.vector_store %arg11[%c0_94, %c9_95], %143 {strides = array<i32>} : memref<44x16xf32, #tpu.memory_space<vmem>>, vector<4x7xf32>,
    %c28_96 = arith.constant 28 : index
    %c0_97 = arith.constant 0 : index
    %145 = vector.load %arg10[%c28_96, %c0_97] : memref<38x16xf32, #tpu.memory_space<vmem>>, vector<10x16xf32>
    %146 = arith.truncf %145 : vector<10x16xf32> to vector<10x16xbf16>
    %cst_98 = arith.constant dense<0.000000e+00> : vector<4x16xf32>
    %147 = tpu.matmul %26, %146, %cst_98 {dimension_numbers = #tpu.dot_dimension_numbers<[1], [0], [0], [1], [0, 0, 1, 1], [], []>} : vector<4x10xbf16>, vector<10x16xbf16>, vector<4x16xf32> -> vector<4x16xf32>
    %148 = vector.broadcast %28 : vector<4x1xf32> to vector<4x16xf32>
    %149 = arith.mulf %147, %148 : vector<4x16xf32>
    %150 = vector.broadcast %30 : vector<4x1xf32> to vector<4x16xf32>
    %151 = arith.addf %149, %150 : vector<4x16xf32>
    %152 = arith.negf %151 : vector<4x16xf32>
    %153 = math.exp %152 : vector<4x16xf32>
    %cst_99 = arith.constant 1.000000e+00 : f32
    %154 = vector.broadcast %cst_99 : f32 to vector<4x16xf32>
    %155 = arith.addf %154, %153 : vector<4x16xf32>
    %156 = arith.divf %154, %155 : vector<4x16xf32>
    %157 = arith.mulf %151, %156 : vector<4x16xf32>
    %c36_100 = arith.constant 36 : index
    %c0_101 = arith.constant 0 : index
    %158 = vector.load %arg11[%c36_100, %c0_101] : memref<44x16xf32, #tpu.memory_space<vmem>>, vector<4x16xf32>
    tpu.vector_store %arg11[%c36_100, %c0_101], %157 {strides = array<i32>} : memref<44x16xf32, #tpu.memory_space<vmem>>, vector<4x16xf32>,
    %cst_102 = arith.constant 0.000000e+00 : f32
    %159 = vector.broadcast %cst_102 : f32 to vector<4x1xf32>
    %c4_103 = arith.constant 4 : index
    %c0_104 = arith.constant 0 : index
    %160 = vector.load %arg11[%c4_103, %c0_104] : memref<44x16xf32, #tpu.memory_space<vmem>>, vector<4x1xf32>
    tpu.vector_store %arg11[%c4_103, %c0_104], %159 {strides = array<i32>} : memref<44x16xf32, #tpu.memory_space<vmem>>, vector<4x1xf32>,
    %161 = vector.extract_strided_slice %157 {offsets = [0, 0], sizes = [4, 7], strides = [1, 1]} : vector<4x16xf32> to vector<4x7xf32>
    %c4_105 = arith.constant 4 : index
    %c1_106 = arith.constant 1 : index
    %162 = vector.load %arg11[%c4_105, %c1_106] : memref<44x16xf32, #tpu.memory_space<vmem>>, vector<4x7xf32>
    tpu.vector_store %arg11[%c4_105, %c1_106], %161 {strides = array<i32>} : memref<44x16xf32, #tpu.memory_space<vmem>>, vector<4x7xf32>,
    %cst_107 = arith.constant 0.000000e+00 : f32
    %163 = vector.broadcast %cst_107 : f32 to vector<4x1xf32>
    %c4_108 = arith.constant 4 : index
    %c8_109 = arith.constant 8 : index
    %164 = vector.load %arg11[%c4_108, %c8_109] : memref<44x16xf32, #tpu.memory_space<vmem>>, vector<4x1xf32>
    tpu.vector_store %arg11[%c4_108, %c8_109], %163 {strides = array<i32>} : memref<44x16xf32, #tpu.memory_space<vmem>>, vector<4x1xf32>,
    %165 = vector.extract_strided_slice %157 {offsets = [0, 8], sizes = [4, 7], strides = [1, 1]} : vector<4x16xf32> to vector<4x7xf32>
    %c4_110 = arith.constant 4 : index
    %c9_111 = arith.constant 9 : index
    %166 = vector.load %arg11[%c4_110, %c9_111] : memref<44x16xf32, #tpu.memory_space<vmem>>, vector<4x7xf32>
    tpu.vector_store %arg11[%c4_110, %c9_111], %165 {strides = array<i32>} : memref<44x16xf32, #tpu.memory_space<vmem>>, vector<4x7xf32>,
    %c0_112 = arith.constant 0 : index
    %c0_113 = arith.constant 0 : index
    %167 = vector.load %arg3[%c0_112, %c0_113] : memref<8x20xbf16, #tpu.memory_space<vmem>>, vector<8x20xbf16>
    %c0_114 = arith.constant 0 : index
    %c4_115 = arith.constant 4 : index
    %c0_116 = arith.constant 0 : index
    %168 = vector.load %arg8[%c0_114, %c4_115, %c0_116] : memref<2x60x1xf32, #tpu.memory_space<vmem>>, vector<1x8x1xf32>
    %169 = vector.shape_cast %168 : vector<1x8x1xf32> to vector<8x1xf32>
    %c1_117 = arith.constant 1 : index
    %c4_118 = arith.constant 4 : index
    %c0_119 = arith.constant 0 : index
    %170 = vector.load %arg8[%c1_117, %c4_118, %c0_119] : memref<2x60x1xf32, #tpu.memory_space<vmem>>, vector<1x8x1xf32>
    %171 = vector.shape_cast %170 : vector<1x8x1xf32> to vector<8x1xf32>
    %c0_120 = arith.constant 0 : index
    %c0_121 = arith.constant 0 : index
    %172 = vector.load %arg11[%c0_120, %c0_121] : memref<44x16xf32, #tpu.memory_space<vmem>>, vector<20x16xf32>
    %173 = arith.truncf %172 : vector<20x16xf32> to vector<20x16xbf16>
    %cst_122 = arith.constant dense<0.000000e+00> : vector<8x16xf32>
    %174 = tpu.matmul %167, %173, %cst_122 {dimension_numbers = #tpu.dot_dimension_numbers<[1], [0], [0], [1], [0, 0, 1, 1], [], []>} : vector<8x20xbf16>, vector<20x16xbf16>, vector<8x16xf32> -> vector<8x16xf32>
    %175 = vector.broadcast %169 : vector<8x1xf32> to vector<8x16xf32>
    %176 = arith.mulf %174, %175 : vector<8x16xf32>
    %177 = vector.broadcast %171 : vector<8x1xf32> to vector<8x16xf32>
    %178 = arith.addf %176, %177 : vector<8x16xf32>
    %179 = arith.negf %178 : vector<8x16xf32>
    %180 = math.exp %179 : vector<8x16xf32>
    %cst_123 = arith.constant 1.000000e+00 : f32
    %181 = vector.broadcast %cst_123 : f32 to vector<8x16xf32>
    %182 = arith.addf %181, %180 : vector<8x16xf32>
    %183 = arith.divf %181, %182 : vector<8x16xf32>
    %184 = arith.mulf %178, %183 : vector<8x16xf32>
    %c16_124 = arith.constant 16 : index
    %c0_125 = arith.constant 0 : index
    %185 = vector.load %arg12[%c16_124, %c0_125] : memref<56x16xf32, #tpu.memory_space<vmem>>, vector<8x16xf32>
    tpu.vector_store %arg12[%c16_124, %c0_125], %184 {strides = array<i32>} : memref<56x16xf32, #tpu.memory_space<vmem>>, vector<8x16xf32>,
    %186 = vector.extract_strided_slice %184 {offsets = [0, 1], sizes = [8, 7], strides = [1, 1]} : vector<8x16xf32> to vector<8x7xf32>
    %c48 = arith.constant 48 : index
    %c0_126 = arith.constant 0 : index
    %187 = vector.load %arg12[%c48, %c0_126] : memref<56x16xf32, #tpu.memory_space<vmem>>, vector<8x7xf32>
    tpu.vector_store %arg12[%c48, %c0_126], %186 {strides = array<i32>} : memref<56x16xf32, #tpu.memory_space<vmem>>, vector<8x7xf32>,
    %cst_127 = arith.constant 0.000000e+00 : f32
    %188 = vector.broadcast %cst_127 : f32 to vector<8x1xf32>
    %c48_128 = arith.constant 48 : index
    %c7_129 = arith.constant 7 : index
    %189 = vector.load %arg12[%c48_128, %c7_129] : memref<56x16xf32, #tpu.memory_space<vmem>>, vector<8x1xf32>
    tpu.vector_store %arg12[%c48_128, %c7_129], %188 {strides = array<i32>} : memref<56x16xf32, #tpu.memory_space<vmem>>, vector<8x1xf32>,
    %190 = vector.extract_strided_slice %184 {offsets = [0, 9], sizes = [8, 7], strides = [1, 1]} : vector<8x16xf32> to vector<8x7xf32>
    %c48_130 = arith.constant 48 : index
    %c8_131 = arith.constant 8 : index
    %191 = vector.load %arg12[%c48_130, %c8_131] : memref<56x16xf32, #tpu.memory_space<vmem>>, vector<8x7xf32>
    tpu.vector_store %arg12[%c48_130, %c8_131], %190 {strides = array<i32>} : memref<56x16xf32, #tpu.memory_space<vmem>>, vector<8x7xf32>,
    %cst_132 = arith.constant 0.000000e+00 : f32
    %192 = vector.broadcast %cst_132 : f32 to vector<8x1xf32>
    %c48_133 = arith.constant 48 : index
    %c15_134 = arith.constant 15 : index
    %193 = vector.load %arg12[%c48_133, %c15_134] : memref<56x16xf32, #tpu.memory_space<vmem>>, vector<8x1xf32>
    tpu.vector_store %arg12[%c48_133, %c15_134], %192 {strides = array<i32>} : memref<56x16xf32, #tpu.memory_space<vmem>>, vector<8x1xf32>,
    %c8_135 = arith.constant 8 : index
    %c0_136 = arith.constant 0 : index
    %194 = vector.load %arg11[%c8_135, %c0_136] : memref<44x16xf32, #tpu.memory_space<vmem>>, vector<20x16xf32>
    %195 = arith.truncf %194 : vector<20x16xf32> to vector<20x16xbf16>
    %cst_137 = arith.constant dense<0.000000e+00> : vector<8x16xf32>
    %196 = tpu.matmul %167, %195, %cst_137 {dimension_numbers = #tpu.dot_dimension_numbers<[1], [0], [0], [1], [0, 0, 1, 1], [], []>} : vector<8x20xbf16>, vector<20x16xbf16>, vector<8x16xf32> -> vector<8x16xf32>
    %197 = vector.broadcast %169 : vector<8x1xf32> to vector<8x16xf32>
    %198 = arith.mulf %196, %197 : vector<8x16xf32>
    %199 = vector.broadcast %171 : vector<8x1xf32> to vector<8x16xf32>
    %200 = arith.addf %198, %199 : vector<8x16xf32>
    %201 = arith.negf %200 : vector<8x16xf32>
    %202 = math.exp %201 : vector<8x16xf32>
    %cst_138 = arith.constant 1.000000e+00 : f32
    %203 = vector.broadcast %cst_138 : f32 to vector<8x16xf32>
    %204 = arith.addf %203, %202 : vector<8x16xf32>
    %205 = arith.divf %203, %204 : vector<8x16xf32>
    %206 = arith.mulf %200, %205 : vector<8x16xf32>
    %c24_139 = arith.constant 24 : index
    %c0_140 = arith.constant 0 : index
    %207 = vector.load %arg12[%c24_139, %c0_140] : memref<56x16xf32, #tpu.memory_space<vmem>>, vector<8x16xf32>
    tpu.vector_store %arg12[%c24_139, %c0_140], %206 {strides = array<i32>} : memref<56x16xf32, #tpu.memory_space<vmem>>, vector<8x16xf32>,
    %c16_141 = arith.constant 16 : index
    %c0_142 = arith.constant 0 : index
    %208 = vector.load %arg11[%c16_141, %c0_142] : memref<44x16xf32, #tpu.memory_space<vmem>>, vector<20x16xf32>
    %209 = arith.truncf %208 : vector<20x16xf32> to vector<20x16xbf16>
    %cst_143 = arith.constant dense<0.000000e+00> : vector<8x16xf32>
    %210 = tpu.matmul %167, %209, %cst_143 {dimension_numbers = #tpu.dot_dimension_numbers<[1], [0], [0], [1], [0, 0, 1, 1], [], []>} : vector<8x20xbf16>, vector<20x16xbf16>, vector<8x16xf32> -> vector<8x16xf32>
    %211 = vector.broadcast %169 : vector<8x1xf32> to vector<8x16xf32>
    %212 = arith.mulf %210, %211 : vector<8x16xf32>
    %213 = vector.broadcast %171 : vector<8x1xf32> to vector<8x16xf32>
    %214 = arith.addf %212, %213 : vector<8x16xf32>
    %215 = arith.negf %214 : vector<8x16xf32>
    %216 = math.exp %215 : vector<8x16xf32>
    %cst_144 = arith.constant 1.000000e+00 : f32
    %217 = vector.broadcast %cst_144 : f32 to vector<8x16xf32>
    %218 = arith.addf %217, %216 : vector<8x16xf32>
    %219 = arith.divf %217, %218 : vector<8x16xf32>
    %220 = arith.mulf %214, %219 : vector<8x16xf32>
    %c32_145 = arith.constant 32 : index
    %c0_146 = arith.constant 0 : index
    %221 = vector.load %arg12[%c32_145, %c0_146] : memref<56x16xf32, #tpu.memory_space<vmem>>, vector<8x16xf32>
    tpu.vector_store %arg12[%c32_145, %c0_146], %220 {strides = array<i32>} : memref<56x16xf32, #tpu.memory_space<vmem>>, vector<8x16xf32>,
    %cst_147 = arith.constant 0.000000e+00 : f32
    %222 = vector.broadcast %cst_147 : f32 to vector<8x1xf32>
    %c0_148 = arith.constant 0 : index
    %c0_149 = arith.constant 0 : index
    %223 = vector.load %arg12[%c0_148, %c0_149] : memref<56x16xf32, #tpu.memory_space<vmem>>, vector<8x1xf32>
    tpu.vector_store %arg12[%c0_148, %c0_149], %222 {strides = array<i32>} : memref<56x16xf32, #tpu.memory_space<vmem>>, vector<8x1xf32>,
    %224 = vector.extract_strided_slice %220 {offsets = [0, 0], sizes = [8, 7], strides = [1, 1]} : vector<8x16xf32> to vector<8x7xf32>
    %c0_150 = arith.constant 0 : index
    %c1_151 = arith.constant 1 : index
    %225 = vector.load %arg12[%c0_150, %c1_151] : memref<56x16xf32, #tpu.memory_space<vmem>>, vector<8x7xf32>
    tpu.vector_store %arg12[%c0_150, %c1_151], %224 {strides = array<i32>} : memref<56x16xf32, #tpu.memory_space<vmem>>, vector<8x7xf32>,
    %cst_152 = arith.constant 0.000000e+00 : f32
    %226 = vector.broadcast %cst_152 : f32 to vector<8x1xf32>
    %c0_153 = arith.constant 0 : index
    %c8_154 = arith.constant 8 : index
    %227 = vector.load %arg12[%c0_153, %c8_154] : memref<56x16xf32, #tpu.memory_space<vmem>>, vector<8x1xf32>
    tpu.vector_store %arg12[%c0_153, %c8_154], %226 {strides = array<i32>} : memref<56x16xf32, #tpu.memory_space<vmem>>, vector<8x1xf32>,
    %228 = vector.extract_strided_slice %220 {offsets = [0, 8], sizes = [8, 7], strides = [1, 1]} : vector<8x16xf32> to vector<8x7xf32>
    %c0_155 = arith.constant 0 : index
    %c9_156 = arith.constant 9 : index
    %229 = vector.load %arg12[%c0_155, %c9_156] : memref<56x16xf32, #tpu.memory_space<vmem>>, vector<8x7xf32>
    tpu.vector_store %arg12[%c0_155, %c9_156], %228 {strides = array<i32>} : memref<56x16xf32, #tpu.memory_space<vmem>>, vector<8x7xf32>,
    %c24_157 = arith.constant 24 : index
    %c0_158 = arith.constant 0 : index
    %230 = vector.load %arg11[%c24_157, %c0_158] : memref<44x16xf32, #tpu.memory_space<vmem>>, vector<20x16xf32>
    %231 = arith.truncf %230 : vector<20x16xf32> to vector<20x16xbf16>
    %cst_159 = arith.constant dense<0.000000e+00> : vector<8x16xf32>
    %232 = tpu.matmul %167, %231, %cst_159 {dimension_numbers = #tpu.dot_dimension_numbers<[1], [0], [0], [1], [0, 0, 1, 1], [], []>} : vector<8x20xbf16>, vector<20x16xbf16>, vector<8x16xf32> -> vector<8x16xf32>
    %233 = vector.broadcast %169 : vector<8x1xf32> to vector<8x16xf32>
    %234 = arith.mulf %232, %233 : vector<8x16xf32>
    %235 = vector.broadcast %171 : vector<8x1xf32> to vector<8x16xf32>
    %236 = arith.addf %234, %235 : vector<8x16xf32>
    %237 = arith.negf %236 : vector<8x16xf32>
    %238 = math.exp %237 : vector<8x16xf32>
    %cst_160 = arith.constant 1.000000e+00 : f32
    %239 = vector.broadcast %cst_160 : f32 to vector<8x16xf32>
    %240 = arith.addf %239, %238 : vector<8x16xf32>
    %241 = arith.divf %239, %240 : vector<8x16xf32>
    %242 = arith.mulf %236, %241 : vector<8x16xf32>
    %c40_161 = arith.constant 40 : index
    %c0_162 = arith.constant 0 : index
    %243 = vector.load %arg12[%c40_161, %c0_162] : memref<56x16xf32, #tpu.memory_space<vmem>>, vector<8x16xf32>
    tpu.vector_store %arg12[%c40_161, %c0_162], %242 {strides = array<i32>} : memref<56x16xf32, #tpu.memory_space<vmem>>, vector<8x16xf32>,
    %cst_163 = arith.constant 0.000000e+00 : f32
    %244 = vector.broadcast %cst_163 : f32 to vector<8x1xf32>
    %c8_164 = arith.constant 8 : index
    %c0_165 = arith.constant 0 : index
    %245 = vector.load %arg12[%c8_164, %c0_165] : memref<56x16xf32, #tpu.memory_space<vmem>>, vector<8x1xf32>
    tpu.vector_store %arg12[%c8_164, %c0_165], %244 {strides = array<i32>} : memref<56x16xf32, #tpu.memory_space<vmem>>, vector<8x1xf32>,
    %246 = vector.extract_strided_slice %242 {offsets = [0, 0], sizes = [8, 7], strides = [1, 1]} : vector<8x16xf32> to vector<8x7xf32>
    %c8_166 = arith.constant 8 : index
    %c1_167 = arith.constant 1 : index
    %247 = vector.load %arg12[%c8_166, %c1_167] : memref<56x16xf32, #tpu.memory_space<vmem>>, vector<8x7xf32>
    tpu.vector_store %arg12[%c8_166, %c1_167], %246 {strides = array<i32>} : memref<56x16xf32, #tpu.memory_space<vmem>>, vector<8x7xf32>,
    %cst_168 = arith.constant 0.000000e+00 : f32
    %248 = vector.broadcast %cst_168 : f32 to vector<8x1xf32>
    %c8_169 = arith.constant 8 : index
    %c8_170 = arith.constant 8 : index
    %249 = vector.load %arg12[%c8_169, %c8_170] : memref<56x16xf32, #tpu.memory_space<vmem>>, vector<8x1xf32>
    tpu.vector_store %arg12[%c8_169, %c8_170], %248 {strides = array<i32>} : memref<56x16xf32, #tpu.memory_space<vmem>>, vector<8x1xf32>,
    %250 = vector.extract_strided_slice %242 {offsets = [0, 8], sizes = [8, 7], strides = [1, 1]} : vector<8x16xf32> to vector<8x7xf32>
    %c8_171 = arith.constant 8 : index
    %c9_172 = arith.constant 9 : index
    %251 = vector.load %arg12[%c8_171, %c9_172] : memref<56x16xf32, #tpu.memory_space<vmem>>, vector<8x7xf32>
    tpu.vector_store %arg12[%c8_171, %c9_172], %250 {strides = array<i32>} : memref<56x16xf32, #tpu.memory_space<vmem>>, vector<8x7xf32>,
    %c0_173 = arith.constant 0 : index
    %c0_174 = arith.constant 0 : index
    %252 = vector.load %arg4[%c0_173, %c0_174] : memref<16x40xbf16, #tpu.memory_space<vmem>>, vector<16x40xbf16>
    %c0_175 = arith.constant 0 : index
    %c12_176 = arith.constant 12 : index
    %c0_177 = arith.constant 0 : index
    %253 = vector.load %arg8[%c0_175, %c12_176, %c0_177] : memref<2x60x1xf32, #tpu.memory_space<vmem>>, vector<1x16x1xf32>
    %254 = vector.shape_cast %253 : vector<1x16x1xf32> to vector<16x1xf32>
    %c1_178 = arith.constant 1 : index
    %c12_179 = arith.constant 12 : index
    %c0_180 = arith.constant 0 : index
    %255 = vector.load %arg8[%c1_178, %c12_179, %c0_180] : memref<2x60x1xf32, #tpu.memory_space<vmem>>, vector<1x16x1xf32>
    %256 = vector.shape_cast %255 : vector<1x16x1xf32> to vector<16x1xf32>
    %c0_181 = arith.constant 0 : index
    %c0_182 = arith.constant 0 : index
    %257 = vector.load %arg12[%c0_181, %c0_182] : memref<56x16xf32, #tpu.memory_space<vmem>>, vector<40x16xf32>
    %258 = arith.truncf %257 : vector<40x16xf32> to vector<40x16xbf16>
    %cst_183 = arith.constant dense<0.000000e+00> : vector<16x16xf32>
    %259 = tpu.matmul %252, %258, %cst_183 {dimension_numbers = #tpu.dot_dimension_numbers<[1], [0], [0], [1], [0, 0, 1, 1], [], []>} : vector<16x40xbf16>, vector<40x16xbf16>, vector<16x16xf32> -> vector<16x16xf32>
    %260 = vector.broadcast %254 : vector<16x1xf32> to vector<16x16xf32>
    %261 = arith.mulf %259, %260 : vector<16x16xf32>
    %262 = vector.broadcast %256 : vector<16x1xf32> to vector<16x16xf32>
    %263 = arith.addf %261, %262 : vector<16x16xf32>
    %264 = arith.negf %263 : vector<16x16xf32>
    %265 = math.exp %264 : vector<16x16xf32>
    %cst_184 = arith.constant 1.000000e+00 : f32
    %266 = vector.broadcast %cst_184 : f32 to vector<16x16xf32>
    %267 = arith.addf %266, %265 : vector<16x16xf32>
    %268 = arith.divf %266, %267 : vector<16x16xf32>
    %269 = arith.mulf %263, %268 : vector<16x16xf32>
    %c32_185 = arith.constant 32 : index
    %c0_186 = arith.constant 0 : index
    %270 = vector.load %arg13[%c32_185, %c0_186] : memref<80x16xf32, #tpu.memory_space<vmem>>, vector<16x16xf32>
    tpu.vector_store %arg13[%c32_185, %c0_186], %269 {strides = array<i32>} : memref<80x16xf32, #tpu.memory_space<vmem>>, vector<16x16xf32>,
    %cst_187 = arith.constant 0.000000e+00 : f32
    %271 = vector.broadcast %cst_187 : f32 to vector<16x1xf32>
    %c0_188 = arith.constant 0 : index
    %c0_189 = arith.constant 0 : index
    %272 = vector.load %arg13[%c0_188, %c0_189] : memref<80x16xf32, #tpu.memory_space<vmem>>, vector<16x1xf32>
    tpu.vector_store %arg13[%c0_188, %c0_189], %271 {strides = array<i32>} : memref<80x16xf32, #tpu.memory_space<vmem>>, vector<16x1xf32>,
    %273 = vector.extract_strided_slice %269 {offsets = [0, 0], sizes = [16, 7], strides = [1, 1]} : vector<16x16xf32> to vector<16x7xf32>
    %c0_190 = arith.constant 0 : index
    %c1_191 = arith.constant 1 : index
    %274 = vector.load %arg13[%c0_190, %c1_191] : memref<80x16xf32, #tpu.memory_space<vmem>>, vector<16x7xf32>
    tpu.vector_store %arg13[%c0_190, %c1_191], %273 {strides = array<i32>} : memref<80x16xf32, #tpu.memory_space<vmem>>, vector<16x7xf32>,
    %275 = vector.extract_strided_slice %269 {offsets = [0, 1], sizes = [16, 7], strides = [1, 1]} : vector<16x16xf32> to vector<16x7xf32>
    %c64 = arith.constant 64 : index
    %c0_192 = arith.constant 0 : index
    %276 = vector.load %arg13[%c64, %c0_192] : memref<80x16xf32, #tpu.memory_space<vmem>>, vector<16x7xf32>
    tpu.vector_store %arg13[%c64, %c0_192], %275 {strides = array<i32>} : memref<80x16xf32, #tpu.memory_space<vmem>>, vector<16x7xf32>,
    %cst_193 = arith.constant 0.000000e+00 : f32
    %277 = vector.broadcast %cst_193 : f32 to vector<16x1xf32>
    %c64_194 = arith.constant 64 : index
    %c7_195 = arith.constant 7 : index
    %278 = vector.load %arg13[%c64_194, %c7_195] : memref<80x16xf32, #tpu.memory_space<vmem>>, vector<16x1xf32>
    tpu.vector_store %arg13[%c64_194, %c7_195], %277 {strides = array<i32>} : memref<80x16xf32, #tpu.memory_space<vmem>>, vector<16x1xf32>,
    %cst_196 = arith.constant 0.000000e+00 : f32
    %279 = vector.broadcast %cst_196 : f32 to vector<16x1xf32>
    %c0_197 = arith.constant 0 : index
    %c8_198 = arith.constant 8 : index
    %280 = vector.load %arg13[%c0_197, %c8_198] : memref<80x16xf32, #tpu.memory_space<vmem>>, vector<16x1xf32>
    tpu.vector_store %arg13[%c0_197, %c8_198], %279 {strides = array<i32>} : memref<80x16xf32, #tpu.memory_space<vmem>>, vector<16x1xf32>,
    %281 = vector.extract_strided_slice %269 {offsets = [0, 8], sizes = [16, 7], strides = [1, 1]} : vector<16x16xf32> to vector<16x7xf32>
    %c0_199 = arith.constant 0 : index
    %c9_200 = arith.constant 9 : index
    %282 = vector.load %arg13[%c0_199, %c9_200] : memref<80x16xf32, #tpu.memory_space<vmem>>, vector<16x7xf32>
    tpu.vector_store %arg13[%c0_199, %c9_200], %281 {strides = array<i32>} : memref<80x16xf32, #tpu.memory_space<vmem>>, vector<16x7xf32>,
    %283 = vector.extract_strided_slice %269 {offsets = [0, 9], sizes = [16, 7], strides = [1, 1]} : vector<16x16xf32> to vector<16x7xf32>
    %c64_201 = arith.constant 64 : index
    %c8_202 = arith.constant 8 : index
    %284 = vector.load %arg13[%c64_201, %c8_202] : memref<80x16xf32, #tpu.memory_space<vmem>>, vector<16x7xf32>
    tpu.vector_store %arg13[%c64_201, %c8_202], %283 {strides = array<i32>} : memref<80x16xf32, #tpu.memory_space<vmem>>, vector<16x7xf32>,
    %cst_203 = arith.constant 0.000000e+00 : f32
    %285 = vector.broadcast %cst_203 : f32 to vector<16x1xf32>
    %c64_204 = arith.constant 64 : index
    %c15_205 = arith.constant 15 : index
    %286 = vector.load %arg13[%c64_204, %c15_205] : memref<80x16xf32, #tpu.memory_space<vmem>>, vector<16x1xf32>
    tpu.vector_store %arg13[%c64_204, %c15_205], %285 {strides = array<i32>} : memref<80x16xf32, #tpu.memory_space<vmem>>, vector<16x1xf32>,
    %c16_206 = arith.constant 16 : index
    %c0_207 = arith.constant 0 : index
    %287 = vector.load %arg12[%c16_206, %c0_207] : memref<56x16xf32, #tpu.memory_space<vmem>>, vector<40x16xf32>
    %288 = arith.truncf %287 : vector<40x16xf32> to vector<40x16xbf16>
    %cst_208 = arith.constant dense<0.000000e+00> : vector<16x16xf32>
    %289 = tpu.matmul %252, %288, %cst_208 {dimension_numbers = #tpu.dot_dimension_numbers<[1], [0], [0], [1], [0, 0, 1, 1], [], []>} : vector<16x40xbf16>, vector<40x16xbf16>, vector<16x16xf32> -> vector<16x16xf32>
    %290 = vector.broadcast %254 : vector<16x1xf32> to vector<16x16xf32>
    %291 = arith.mulf %289, %290 : vector<16x16xf32>
    %292 = vector.broadcast %256 : vector<16x1xf32> to vector<16x16xf32>
    %293 = arith.addf %291, %292 : vector<16x16xf32>
    %294 = arith.negf %293 : vector<16x16xf32>
    %295 = math.exp %294 : vector<16x16xf32>
    %cst_209 = arith.constant 1.000000e+00 : f32
    %296 = vector.broadcast %cst_209 : f32 to vector<16x16xf32>
    %297 = arith.addf %296, %295 : vector<16x16xf32>
    %298 = arith.divf %296, %297 : vector<16x16xf32>
    %299 = arith.mulf %293, %298 : vector<16x16xf32>
    %c48_210 = arith.constant 48 : index
    %c0_211 = arith.constant 0 : index
    %300 = vector.load %arg13[%c48_210, %c0_211] : memref<80x16xf32, #tpu.memory_space<vmem>>, vector<16x16xf32>
    tpu.vector_store %arg13[%c48_210, %c0_211], %299 {strides = array<i32>} : memref<80x16xf32, #tpu.memory_space<vmem>>, vector<16x16xf32>,
    %cst_212 = arith.constant 0.000000e+00 : f32
    %301 = vector.broadcast %cst_212 : f32 to vector<16x1xf32>
    %c16_213 = arith.constant 16 : index
    %c0_214 = arith.constant 0 : index
    %302 = vector.load %arg13[%c16_213, %c0_214] : memref<80x16xf32, #tpu.memory_space<vmem>>, vector<16x1xf32>
    tpu.vector_store %arg13[%c16_213, %c0_214], %301 {strides = array<i32>} : memref<80x16xf32, #tpu.memory_space<vmem>>, vector<16x1xf32>,
    %303 = vector.extract_strided_slice %299 {offsets = [0, 0], sizes = [16, 7], strides = [1, 1]} : vector<16x16xf32> to vector<16x7xf32>
    %c16_215 = arith.constant 16 : index
    %c1_216 = arith.constant 1 : index
    %304 = vector.load %arg13[%c16_215, %c1_216] : memref<80x16xf32, #tpu.memory_space<vmem>>, vector<16x7xf32>
    tpu.vector_store %arg13[%c16_215, %c1_216], %303 {strides = array<i32>} : memref<80x16xf32, #tpu.memory_space<vmem>>, vector<16x7xf32>,
    %cst_217 = arith.constant 0.000000e+00 : f32
    %305 = vector.broadcast %cst_217 : f32 to vector<16x1xf32>
    %c16_218 = arith.constant 16 : index
    %c8_219 = arith.constant 8 : index
    %306 = vector.load %arg13[%c16_218, %c8_219] : memref<80x16xf32, #tpu.memory_space<vmem>>, vector<16x1xf32>
    tpu.vector_store %arg13[%c16_218, %c8_219], %305 {strides = array<i32>} : memref<80x16xf32, #tpu.memory_space<vmem>>, vector<16x1xf32>,
    %307 = vector.extract_strided_slice %299 {offsets = [0, 8], sizes = [16, 7], strides = [1, 1]} : vector<16x16xf32> to vector<16x7xf32>
    %c16_220 = arith.constant 16 : index
    %c9_221 = arith.constant 9 : index
    %308 = vector.load %arg13[%c16_220, %c9_221] : memref<80x16xf32, #tpu.memory_space<vmem>>, vector<16x7xf32>
    tpu.vector_store %arg13[%c16_220, %c9_221], %307 {strides = array<i32>} : memref<80x16xf32, #tpu.memory_space<vmem>>, vector<16x7xf32>,
    %c0_222 = arith.constant 0 : index
    %c0_223 = arith.constant 0 : index
    %309 = vector.load %arg5[%c0_222, %c0_223] : memref<32x80xbf16, #tpu.memory_space<vmem>>, vector<32x80xbf16>
    %c0_224 = arith.constant 0 : index
    %c28_225 = arith.constant 28 : index
    %c0_226 = arith.constant 0 : index
    %310 = vector.load %arg8[%c0_224, %c28_225, %c0_226] : memref<2x60x1xf32, #tpu.memory_space<vmem>>, vector<1x32x1xf32>
    %311 = vector.shape_cast %310 : vector<1x32x1xf32> to vector<32x1xf32>
    %c1_227 = arith.constant 1 : index
    %c28_228 = arith.constant 28 : index
    %c0_229 = arith.constant 0 : index
    %312 = vector.load %arg8[%c1_227, %c28_228, %c0_229] : memref<2x60x1xf32, #tpu.memory_space<vmem>>, vector<1x32x1xf32>
    %313 = vector.shape_cast %312 : vector<1x32x1xf32> to vector<32x1xf32>
    %c0_230 = arith.constant 0 : index
    %c0_231 = arith.constant 0 : index
    %314 = vector.load %arg13[%c0_230, %c0_231] : memref<80x16xf32, #tpu.memory_space<vmem>>, vector<80x16xf32>
    %315 = arith.truncf %314 : vector<80x16xf32> to vector<80x16xbf16>
    %cst_232 = arith.constant dense<0.000000e+00> : vector<32x16xf32>
    %316 = tpu.matmul %309, %315, %cst_232 {dimension_numbers = #tpu.dot_dimension_numbers<[1], [0], [0], [1], [0, 0, 1, 1], [], []>} : vector<32x80xbf16>, vector<80x16xbf16>, vector<32x16xf32> -> vector<32x16xf32>
    %317 = vector.broadcast %311 : vector<32x1xf32> to vector<32x16xf32>
    %318 = arith.mulf %316, %317 : vector<32x16xf32>
    %319 = vector.broadcast %313 : vector<32x1xf32> to vector<32x16xf32>
    %320 = arith.addf %318, %319 : vector<32x16xf32>
    %321 = arith.negf %320 : vector<32x16xf32>
    %322 = math.exp %321 : vector<32x16xf32>
    %cst_233 = arith.constant 1.000000e+00 : f32
    %323 = vector.broadcast %cst_233 : f32 to vector<32x16xf32>
    %324 = arith.addf %323, %322 : vector<32x16xf32>
    %325 = arith.divf %323, %324 : vector<32x16xf32>
    %326 = arith.mulf %320, %325 : vector<32x16xf32>
    %c0_234 = arith.constant 0 : index
    %c0_235 = arith.constant 0 : index
    %327 = vector.load %arg6[%c0_234, %c0_235] : memref<32x32xbf16, #tpu.memory_space<vmem>>, vector<32x32xbf16>
    %328 = arith.truncf %326 : vector<32x16xf32> to vector<32x16xbf16>
    %cst_236 = arith.constant dense<0.000000e+00> : vector<32x16xf32>
    %329 = tpu.matmul %327, %328, %cst_236 {dimension_numbers = #tpu.dot_dimension_numbers<[1], [0], [0], [1], [0, 0, 1, 1], [], []>} : vector<32x32xbf16>, vector<32x16xbf16>, vector<32x16xf32> -> vector<32x16xf32>
    %c0_237 = arith.constant 0 : index
    %c0_238 = arith.constant 0 : index
    %330 = vector.load %arg7[%c0_237, %c0_238] : memref<32x1xf32, #tpu.memory_space<vmem>>, vector<32x1xf32>
    %331 = vector.broadcast %330 : vector<32x1xf32> to vector<32x16xf32>
    %332 = arith.addf %329, %331 : vector<32x16xf32>
    %333 = vector.extract_strided_slice %332 {offsets = [0, 0], sizes = [32, 8], strides = [1, 1]} : vector<32x16xf32> to vector<32x8xf32>
    %c0_239 = arith.constant 0 : index
    %c0_240 = arith.constant 0 : index
    %c0_241 = arith.constant 0 : index
    %334 = vector.load %arg9[%c0_239, %c0_240, %c0_241] : memref<2x32x8xf32, #tpu.memory_space<vmem>>, vector<1x32x8xf32>
    %335 = vector.shape_cast %334 : vector<1x32x8xf32> to vector<32x8xf32>
    %336 = vector.shape_cast %333 : vector<32x8xf32> to vector<1x32x8xf32>
    tpu.vector_store %arg9[%c0_239, %c0_240, %c0_241], %336 {strides = array<i32>} : memref<2x32x8xf32, #tpu.memory_space<vmem>>, vector<1x32x8xf32>,
    %337 = vector.extract_strided_slice %332 {offsets = [0, 8], sizes = [32, 8], strides = [1, 1]} : vector<32x16xf32> to vector<32x8xf32>
    %c1_242 = arith.constant 1 : index
    %c0_243 = arith.constant 0 : index
    %c0_244 = arith.constant 0 : index
    %338 = vector.load %arg9[%c1_242, %c0_243, %c0_244] : memref<2x32x8xf32, #tpu.memory_space<vmem>>, vector<1x32x8xf32>
    %339 = vector.shape_cast %338 : vector<1x32x8xf32> to vector<32x8xf32>
    %340 = vector.shape_cast %337 : vector<32x8xf32> to vector<1x32x8xf32>
    tpu.vector_store %arg9[%c1_242, %c0_243, %c0_244], %340 {strides = array<i32>} : memref<2x32x8xf32, #tpu.memory_space<vmem>>, vector<1x32x8xf32>,
    return
  }
  func.func @transform_0(%arg0: i32) -> (i32, i32, i32) {
    %c0_i32 = arith.constant 0 : i32
    %c0_i32_0 = arith.constant 0 : i32
    %c0_i32_1 = arith.constant 0 : i32
    return %arg0, %c0_i32, %c0_i32_0 : i32, i32, i32
  }
  func.func @transform_1(%arg0: i32) -> (i32, i32) {
    %c0_i32 = arith.constant 0 : i32
    %c0_i32_0 = arith.constant 0 : i32
    %c0_i32_1 = arith.constant 0 : i32
    return %c0_i32, %c0_i32_0 : i32, i32
  }
  func.func @transform_2(%arg0: i32) -> (i32, i32) {
    %c0_i32 = arith.constant 0 : i32
    %c0_i32_0 = arith.constant 0 : i32
    %c0_i32_1 = arith.constant 0 : i32
    return %c0_i32, %c0_i32_0 : i32, i32
  }
  func.func @transform_3(%arg0: i32) -> (i32, i32) {
    %c0_i32 = arith.constant 0 : i32
    %c0_i32_0 = arith.constant 0 : i32
    %c0_i32_1 = arith.constant 0 : i32
    return %c0_i32, %c0_i32_0 : i32, i32
  }
  func.func @transform_4(%arg0: i32) -> (i32, i32) {
    %c0_i32 = arith.constant 0 : i32
    %c0_i32_0 = arith.constant 0 : i32
    %c0_i32_1 = arith.constant 0 : i32
    return %c0_i32, %c0_i32_0 : i32, i32
  }
  func.func @transform_5(%arg0: i32) -> (i32, i32) {
    %c0_i32 = arith.constant 0 : i32
    %c0_i32_0 = arith.constant 0 : i32
    %c0_i32_1 = arith.constant 0 : i32
    return %c0_i32, %c0_i32_0 : i32, i32
  }
  func.func @transform_6(%arg0: i32) -> (i32, i32) {
    %c0_i32 = arith.constant 0 : i32
    %c0_i32_0 = arith.constant 0 : i32
    %c0_i32_1 = arith.constant 0 : i32
    return %c0_i32, %c0_i32_0 : i32, i32
  }
  func.func @transform_7(%arg0: i32) -> (i32, i32, i32) {
    %c0_i32 = arith.constant 0 : i32
    %c0_i32_0 = arith.constant 0 : i32
    %c0_i32_1 = arith.constant 0 : i32
    %c0_i32_2 = arith.constant 0 : i32
    return %c0_i32, %c0_i32_0, %c0_i32_1 : i32, i32, i32
  }
  func.func @transform_8(%arg0: i32) -> (i32, i32, i32) {
    %c0_i32 = arith.constant 0 : i32
    %c0_i32_0 = arith.constant 0 : i32
    %c0_i32_1 = arith.constant 0 : i32
    return %arg0, %c0_i32, %c0_i32_0 : i32, i32, i32
  }
}

</mosaic_0001>

<llo_original>
// kernel: conv_down_sampler_forward.1
$region0: #{conv_down_sampler_forward.1}
  #allocation0 [shape = 'u32[]', space=smem, size = 0x4, offset = 0x4, fixed_abs, tag = 'smem constant byte address 0x4 - core index']
  #allocation1 [shape = 'u32[144,128]{1,0:T(1,128)}', space=vmem, size = 0x12000, scoped, tag = 'internal scratch']
  #allocation2 [shape = 'f32[38,16]{1,0:T(8,128)}', space=vmem, size = 0x5000, scoped, tag = 'scratch operand']
  #allocation3 [shape = 'f32[44,16]{1,0:T(8,128)}', space=vmem, size = 0x6000, scoped, tag = 'scratch operand']
  #allocation4 [shape = 'f32[56,16]{1,0:T(8,128)}', space=vmem, size = 0x7000, scoped, tag = 'scratch operand']
  #allocation5 [shape = 'f32[80,16]{1,0:T(8,128)}', space=vmem, size = 0xa000, scoped, tag = 'scratch operand']
  %s0 = inlined_call_operand.vmem [shape: f32[8,32,8], index: 0, kind: input, shape index: {}]
  %s1 = inlined_call_operand.vmem [shape: bf16[4,10], index: 1, kind: input, shape index: {}]
  %s2 = inlined_call_operand.vmem [shape: bf16[8,20], index: 2, kind: input, shape index: {}]
  %s3 = inlined_call_operand.vmem [shape: bf16[16,40], index: 3, kind: input, shape index: {}]
  %s4 = inlined_call_operand.vmem [shape: bf16[32,80], index: 4, kind: input, shape index: {}]
  %s5 = inlined_call_operand.vmem [shape: bf16[32,32], index: 5, kind: input, shape index: {}]
  %s6 = inlined_call_operand.vmem [shape: f32[32,1], index: 6, kind: input, shape index: {}]
  %s7 = inlined_call_operand.vmem [shape: f32[2,60,1], index: 7, kind: input, shape index: {}]
  %s8 = inlined_call_operand.vmem [shape: f32[8,32,8], index: 8, kind: output, shape index: {}]
  %s9 = sld [smem:[#allocation0]]
  $region65: #{conv_down_sampler_forward.1} parent=0
    _
  %s11 = ssub.s32 1, %s9
  %s12 = scalar_select 0, %s11, %s9
  loop: start=0, step=1, limit=6
  $region2: #{conv_down_sampler_forward.1} parent=0 // loop_pre_header
    _
  $region3: #{conv_down_sampler_forward.1} parent=0 // loop_header
    %s14 = sphi 0, %s18
    %p15 = scmp.ge.s32.totalorder %s14, 6
    %s24 = sphi 0, %s26
    %s27 = sphi 0, %s24
    %s28 = sphi 0, %s27
    %s44 = sphi 0, %s28
    %s48 = sphi 0, %s48
    %s50 = sphi 0, %s48
    %s51 = sphi 0, %s50
    %s65 = sphi 0, %s51
    %s69 = sphi 0, %s69
    %s71 = sphi 0, %s69
    %s72 = sphi 0, %s71
    %s86 = sphi 0, %s72
    %s90 = sphi 0, %s90
    %s92 = sphi 0, %s90
    %s93 = sphi 0, %s92
    %s107 = sphi 0, %s93
    %s111 = sphi 0, %s111
    %s113 = sphi 0, %s111
    %s114 = sphi 0, %s113
    %s128 = sphi 0, %s114
    %s132 = sphi 0, %s132
    %s134 = sphi 0, %s132
    %s135 = sphi 0, %s134
    %s149 = sphi 0, %s135
    %s153 = sphi 0, %s153
    %s155 = sphi 0, %s153
    %s156 = sphi 0, %s155
    %s170 = sphi 0, %s156
    %s174 = sphi 0, %s174
    %s176 = sphi 0, %s174
    %s177 = sphi 0, %s176
    %s191 = sphi 0, %s177
    %s197 = sphi 0, %s199
    %s200 = sphi 0, %s197
    %s201 = sphi 0, %s200
    %s217 = sphi 0, %s201
  $region4: #{conv_down_sampler_forward.1} parent=0 // loop_header_branch
    %17 = sbr.rel (%p15) target = $region8
  $region5: #{conv_down_sampler_forward.1} parent=0 // loop_body
    %s19 = ssub.s32 %s14, 1
    %s20 = ssub.s32 %s14, 2
    %s21 = sadd.s32 %s14, 1
    %s22 = ssub.s32 %s14, %s21
    %p23 = scmp.eq.s32.totalorder %s22, 0
    %s25 = sadd.s32 %s24, 1
    %s26 = scalar_select %p23, %s24, %s25
    %p29 = pneg %p23
    %p30 = scmp.eq.s32.totalorder %s14, 3
    %p31 = por %p29, %p30
    %p32 = scmp.ne.s32.totalorder %s24, %s27
    %p33 = scmp.eq.s32.totalorder %s14, 0
    %p34 = por %p32, %p33
    %p35 = scmp.ne.s32.totalorder %s24, %s27
    %p36 = scmp.eq.s32.totalorder %s19, 3
    %p37 = por %p35, %p36
    %p38 = scmp.ne.s32.totalorder %s27, %s28
    %p39 = scmp.eq.s32.totalorder %s19, 0
    %p40 = por %p38, %p39
    %p41 = scmp.ne.s32.totalorder %s27, %s28
    %p42 = scmp.eq.s32.totalorder %s20, 3
    %p43 = por %p41, %p42
    %p45 = scmp.ne.s32.totalorder %s28, %s44
    %p46 = scmp.eq.s32.totalorder %s20, 0
    %p47 = por %p45, %p46
    %s49 = sadd.s32 %s48, 1
    %p52 = scmp.eq.s32.totalorder %s14, 3
    %p53 = scmp.ne.s32.totalorder %s48, %s50
    %p54 = scmp.eq.s32.totalorder %s14, 0
    %p55 = por %p53, %p54
    %p56 = scmp.ne.s32.totalorder %s48, %s50
    %p57 = scmp.eq.s32.totalorder %s19, 3
    %p58 = por %p56, %p57
    %p59 = scmp.ne.s32.totalorder %s50, %s51
    %p60 = scmp.eq.s32.totalorder %s19, 0
    %p61 = por %p59, %p60
    %p62 = scmp.ne.s32.totalorder %s50, %s51
    %p63 = scmp.eq.s32.totalorder %s20, 3
    %p64 = por %p62, %p63
    %p66 = scmp.ne.s32.totalorder %s51, %s65
    %p67 = scmp.eq.s32.totalorder %s20, 0
    %p68 = por %p66, %p67
    %s70 = sadd.s32 %s69, 1
    %p73 = scmp.eq.s32.totalorder %s14, 3
    %p74 = scmp.ne.s32.totalorder %s69, %s71
    %p75 = scmp.eq.s32.totalorder %s14, 0
    %p76 = por %p74, %p75
    %p77 = scmp.ne.s32.totalorder %s69, %s71
    %p78 = scmp.eq.s32.totalorder %s19, 3
    %p79 = por %p77, %p78
    %p80 = scmp.ne.s32.totalorder %s71, %s72
    %p81 = scmp.eq.s32.totalorder %s19, 0
    %p82 = por %p80, %p81
    %p83 = scmp.ne.s32.totalorder %s71, %s72
    %p84 = scmp.eq.s32.totalorder %s20, 3
    %p85 = por %p83, %p84
    %p87 = scmp.ne.s32.totalorder %s72, %s86
    %p88 = scmp.eq.s32.totalorder %s20, 0
    %p89 = por %p87, %p88
    %s91 = sadd.s32 %s90, 1
    %p94 = scmp.eq.s32.totalorder %s14, 3
    %p95 = scmp.ne.s32.totalorder %s90, %s92
    %p96 = scmp.eq.s32.totalorder %s14, 0
    %p97 = por %p95, %p96
    %p98 = scmp.ne.s32.totalorder %s90, %s92
    %p99 = scmp.eq.s32.totalorder %s19, 3
    %p100 = por %p98, %p99
    %p101 = scmp.ne.s32.totalorder %s92, %s93
    %p102 = scmp.eq.s32.totalorder %s19, 0
    %p103 = por %p101, %p102
    %p104 = scmp.ne.s32.totalorder %s92, %s93
    %p105 = scmp.eq.s32.totalorder %s20, 3
    %p106 = por %p104, %p105
    %p108 = scmp.ne.s32.totalorder %s93, %s107
    %p109 = scmp.eq.s32.totalorder %s20, 0
    %p110 = por %p108, %p109
    %s112 = sadd.s32 %s111, 1
    %p115 = scmp.eq.s32.totalorder %s14, 3
    %p116 = scmp.ne.s32.totalorder %s111, %s113
    %p117 = scmp.eq.s32.totalorder %s14, 0
    %p118 = por %p116, %p117
    %p119 = scmp.ne.s32.totalorder %s111, %s113
    %p120 = scmp.eq.s32.totalorder %s19, 3
    %p121 = por %p119, %p120
    %p122 = scmp.ne.s32.totalorder %s113, %s114
    %p123 = scmp.eq.s32.totalorder %s19, 0
    %p124 = por %p122, %p123
    %p125 = scmp.ne.s32.totalorder %s113, %s114
    %p126 = scmp.eq.s32.totalorder %s20, 3
    %p127 = por %p125, %p126
    %p129 = scmp.ne.s32.totalorder %s114, %s128
    %p130 = scmp.eq.s32.totalorder %s20, 0
    %p131 = por %p129, %p130
    %s133 = sadd.s32 %s132, 1
    %p136 = scmp.eq.s32.totalorder %s14, 3
    %p137 = scmp.ne.s32.totalorder %s132, %s134
    %p138 = scmp.eq.s32.totalorder %s14, 0
    %p139 = por %p137, %p138
    %p140 = scmp.ne.s32.totalorder %s132, %s134
    %p141 = scmp.eq.s32.totalorder %s19, 3
    %p142 = por %p140, %p141
    %p143 = scmp.ne.s32.totalorder %s134, %s135
    %p144 = scmp.eq.s32.totalorder %s19, 0
    %p145 = por %p143, %p144
    %p146 = scmp.ne.s32.totalorder %s134, %s135
    %p147 = scmp.eq.s32.totalorder %s20, 3
    %p148 = por %p146, %p147
    %p150 = scmp.ne.s32.totalorder %s135, %s149
    %p151 = scmp.eq.s32.totalorder %s20, 0
    %p152 = por %p150, %p151
    %s154 = sadd.s32 %s153, 1
    %p157 = scmp.eq.s32.totalorder %s14, 3
    %p158 = scmp.ne.s32.totalorder %s153, %s155
    %p159 = scmp.eq.s32.totalorder %s14, 0
    %p160 = por %p158, %p159
    %p161 = scmp.ne.s32.totalorder %s153, %s155
    %p162 = scmp.eq.s32.totalorder %s19, 3
    %p163 = por %p161, %p162
    %p164 = scmp.ne.s32.totalorder %s155, %s156
    %p165 = scmp.eq.s32.totalorder %s19, 0
    %p166 = por %p164, %p165
    %p167 = scmp.ne.s32.totalorder %s155, %s156
    %p168 = scmp.eq.s32.totalorder %s20, 3
    %p169 = por %p167, %p168
    %p171 = scmp.ne.s32.totalorder %s156, %s170
    %p172 = scmp.eq.s32.totalorder %s20, 0
    %p173 = por %p171, %p172
    %s175 = sadd.s32 %s174, 1
    %p178 = scmp.eq.s32.totalorder %s14, 3
    %p179 = scmp.ne.s32.totalorder %s174, %s176
    %p180 = scmp.eq.s32.totalorder %s14, 0
    %p181 = por %p179, %p180
    %p182 = scmp.ne.s32.totalorder %s174, %s176
    %p183 = scmp.eq.s32.totalorder %s19, 3
    %p184 = por %p182, %p183
    %p185 = scmp.ne.s32.totalorder %s176, %s177
    %p186 = scmp.eq.s32.totalorder %s19, 0
    %p187 = por %p185, %p186
    %p188 = scmp.ne.s32.totalorder %s176, %s177
    %p189 = scmp.eq.s32.totalorder %s20, 3
    %p190 = por %p188, %p189
    %p192 = scmp.ne.s32.totalorder %s177, %s191
    %p193 = scmp.eq.s32.totalorder %s20, 0
    %p194 = por %p192, %p193
    %s195 = ssub.s32 %s14, %s21
    %p196 = scmp.eq.s32.totalorder %s195, 0
    %s198 = sadd.s32 %s197, 1
    %s199 = scalar_select %p196, %s197, %s198
    %p202 = pneg %p196
    %p203 = scmp.eq.s32.totalorder %s14, 3
    %p204 = por %p202, %p203
    %p205 = scmp.ne.s32.totalorder %s197, %s200
    %p206 = scmp.eq.s32.totalorder %s14, 0
    %p207 = por %p205, %p206
    %p208 = scmp.ne.s32.totalorder %s197, %s200
    %p209 = scmp.eq.s32.totalorder %s19, 3
    %p210 = por %p208, %p209
    %p211 = scmp.ne.s32.totalorder %s200, %s201
    %p212 = scmp.eq.s32.totalorder %s19, 0
    %p213 = por %p211, %p212
    %p214 = scmp.ne.s32.totalorder %s200, %s201
    %p215 = scmp.eq.s32.totalorder %s20, 3
    %p216 = por %p214, %p215
    %p218 = scmp.ne.s32.totalorder %s201, %s217
    %p219 = scmp.eq.s32.totalorder %s20, 0
    %p220 = por %p218, %p219
    %p221 = scmp.le.s32.totalorder 1, %s14
    %p222 = scmp.lt.s32.totalorder %s14, 5
    %p223 = pnand %p221, %p222
    %p224 = pneg %p223
    // Predicated region
    $region9: #{conv_down_sampler_forward.1} parent=5 // pred_check
      _
    $region10: #{conv_down_sampler_forward.1} parent=5 // pred_check_branch
      %226 = sbr.rel (%p223) target = $region12
    $region11: #{conv_down_sampler_forward.1} parent=5 // pred_region
      %s227 = ssub.s32 %s14, 1
      // Predicated region
      $region13: #{conv_down_sampler_forward.1} parent=11 // pred_check
        %p228 = pneg %p61
      $region14: #{conv_down_sampler_forward.1} parent=11 // pred_check_branch
        %230 = sbr.rel (%p228) target = $region16
      $region15: #{conv_down_sampler_forward.1} parent=11 // pred_region
        _
      $region16: #{conv_down_sampler_forward.1} parent=11 // pred_fallthru
        _
      // Predicated region
      $region17: #{conv_down_sampler_forward.1} parent=11 // pred_check
        %p231 = pneg %p82
      $region18: #{conv_down_sampler_forward.1} parent=11 // pred_check_branch
        %233 = sbr.rel (%p231) target = $region20
      $region19: #{conv_down_sampler_forward.1} parent=11 // pred_region
        _
      $region20: #{conv_down_sampler_forward.1} parent=11 // pred_fallthru
        _
      // Predicated region
      $region21: #{conv_down_sampler_forward.1} parent=11 // pred_check
        %p234 = pneg %p103
      $region22: #{conv_down_sampler_forward.1} parent=11 // pred_check_branch
        %236 = sbr.rel (%p234) target = $region24
      $region23: #{conv_down_sampler_forward.1} parent=11 // pred_region
        _
      $region24: #{conv_down_sampler_forward.1} parent=11 // pred_fallthru
        _
      // Predicated region
      $region25: #{conv_down_sampler_forward.1} parent=11 // pred_check
        %p237 = pneg %p124
      $region26: #{conv_down_sampler_forward.1} parent=11 // pred_check_branch
        %239 = sbr.rel (%p237) target = $region28
      $region27: #{conv_down_sampler_forward.1} parent=11 // pred_region
        _
      $region28: #{conv_down_sampler_forward.1} parent=11 // pred_fallthru
        _
      // Predicated region
      $region29: #{conv_down_sampler_forward.1} parent=11 // pred_check
        %p240 = pneg %p145
      $region30: #{conv_down_sampler_forward.1} parent=11 // pred_check_branch
        %242 = sbr.rel (%p240) target = $region32
      $region31: #{conv_down_sampler_forward.1} parent=11 // pred_region
        _
      $region32: #{conv_down_sampler_forward.1} parent=11 // pred_fallthru
        _
      // Predicated region
      $region33: #{conv_down_sampler_forward.1} parent=11 // pred_check
        %p243 = pneg %p166
      $region34: #{conv_down_sampler_forward.1} parent=11 // pred_check_branch
        %245 = sbr.rel (%p243) target = $region36
      $region35: #{conv_down_sampler_forward.1} parent=11 // pred_region
        _
      $region36: #{conv_down_sampler_forward.1} parent=11 // pred_fallthru
        _
      // Predicated region
      $region37: #{conv_down_sampler_forward.1} parent=11 // pred_check
        %p246 = pneg %p187
      $region38: #{conv_down_sampler_forward.1} parent=11 // pred_check_branch
        %248 = sbr.rel (%p246) target = $region40
      $region39: #{conv_down_sampler_forward.1} parent=11 // pred_region
        _
      $region40: #{conv_down_sampler_forward.1} parent=11 // pred_fallthru
        _
    $region12: #{conv_down_sampler_forward.1} parent=5 // pred_fallthru
      _
    %p249 = scmp.lt.s32.totalorder %s14, 4
    // Predicated region
    $region41: #{conv_down_sampler_forward.1} parent=5 // pred_check
      %p250 = pneg %p249
    $region42: #{conv_down_sampler_forward.1} parent=5 // pred_check_branch
      %252 = sbr.rel (%p250) target = $region44
    $region43: #{conv_down_sampler_forward.1} parent=5 // pred_region
      // Predicated region
      $region45: #{conv_down_sampler_forward.1} parent=43 // pred_check
        %p253 = pneg %p34
      $region46: #{conv_down_sampler_forward.1} parent=43 // pred_check_branch
        %255 = sbr.rel (%p253) target = $region48
      $region47: #{conv_down_sampler_forward.1} parent=43 // pred_region
        %s256 = smul.u32 2, %s14
        %p257 = scmp.lt.s32.totalorder %s256, 7
        %s258 = scalar_select %p257, %s256, 7
        %s259 = smul.addr %s258, 4
        %s260 = smul.addr %s259, 8
        %s261 = scalar_lea.vmem %s0, %s260
        %s262 = smul.u32 2, %s14
      $region48: #{conv_down_sampler_forward.1} parent=43 // pred_fallthru
        _
    $region44: #{conv_down_sampler_forward.1} parent=5 // pred_fallthru
      _
    %p263 = scmp.le.s32.totalorder 1, %s14
    %p264 = scmp.lt.s32.totalorder %s14, 5
    %p265 = pnand %p263, %p264
    %p266 = pneg %p265
    // Predicated region
    $region49: #{conv_down_sampler_forward.1} parent=5 // pred_check
      _
    $region50: #{conv_down_sampler_forward.1} parent=5 // pred_check_branch
      %268 = sbr.rel (%p265) target = $region52
    $region51: #{conv_down_sampler_forward.1} parent=5 // pred_region
      %s269 = ssub.s32 %s14, 1
      %s270 = smul.u32 2, %s19
      %p271 = scmp.lt.s32.totalorder %s270, 7
      %s272 = scalar_select %p271, %s270, 7
      %s273 = smul.addr %s272, 4
      %s274 = smul.addr %s273, 8
      %s275 = scalar_lea.vmem %s0, %s274
      %p276 = pneg %p40
      %p277 = pneg %p37
      %p278 = pneg %p61
      %p279 = pneg %p58
      %p280 = pneg %p82
      %p281 = pneg %p79
      %p282 = pneg %p103
      %p283 = pneg %p100
      %p284 = pneg %p124
      %p285 = pneg %p121
      %p286 = pneg %p145
      %p287 = pneg %p142
      %p288 = pneg %p166
      %p289 = pneg %p163
      %p290 = pneg %p187
      %p291 = pneg %p184
      %p292 = pneg %p213
      %p293 = pneg %p210
      %s294 = smul.u32 2, %s19
      %p295 = scmp.lt.s32.totalorder %s294, 7
      %s296 = scalar_select %p295, %s294, 7
      %s297 = smul.addr %s296, 4
      %s298 = smul.addr %s297, 8
      %s299 = scalar_lea.vmem %s8, %s298
      %s300 = smul.u32 2, %s19
      %p301 = scmp.lt.s32.totalorder %s300, 7
      %s302 = scalar_select %p301, %s300, 7
      %s303 = smul.addr %s302, 4
      %s304 = smul.addr %s303, 8
      %s305 = scalar_lea.vmem %s0, %s304
      %s306 = smul.u32 2, %s19
      %s307 = smul.u32 2, %s19
      %p308 = scmp.lt.s32.totalorder %s307, 7
      %s309 = scalar_select %p308, %s307, 7
      %s310 = smul.addr %s309, 4
      %s311 = smul.addr %s310, 8
      %s312 = scalar_lea.vmem %s8, %s311
      %s313 = smul.u32 2, %s19
      %v315 = vld [vmem:[%s305] sm:$0xff]
      %v316 = vld [vmem:[%s305 + $0x8] sm:$0xff]
      %v317 = vld [vmem:[%s305 + $0x10] sm:$0xff]
      %v318 = vld [vmem:[%s305 + $0x18] sm:$0xff]
      %vm319 = vcmask 64512
      %320 = vst.msk [vmem:[#allocation2 + $0x4] sm:$0xff] %vm319, %v315
      %321 = vst.msk [vmem:[#allocation2 + $0xc] sm:$0xff] %vm319, %v316
      %322 = vst.msk [vmem:[#allocation2 + $0x14] sm:$0xff] %vm319, %v317
      %323 = vst.msk [vmem:[#allocation2 + $0x1c] sm:$0xff] %vm319, %v318
      %vm324 = vcmask 3072
      %325 = vst.msk [vmem:[#allocation2] sm:$0xf] %vm324, 0.0
      %v326 = vld [vmem:[%s305 + $0x1c] sm:$0xf]
      %328 = vrot.lane.b32.xlu0 %v326, 1
      %v329 = vpop.permute.xlu0 %328
      %vm331 = vcmask 60424
      %332 = vst.msk [vmem:[#allocation2] sm:$0xf] %vm331, %v329
      %v333 = vld [vmem:[%s305] sm:$0x3]
      %335 = vrot.lane.b32.xlu0 %v333, 127
      %v336 = vpop.permute.xlu0 %335
      %vm338 = vcmask 50176
      %339 = vst.msk [vmem:[#allocation2 + $0x24] sm:$0x3] %vm338, %v336
      %vm340 = vcmask 58424
      %341 = vst.msk [vmem:[#allocation2 + $0x24] sm:$0x3] %vm340, 0.0
      %s342 = scalar_lea.vmem %s305, 32
      %v343 = vld [vmem:[%s342] sm:$0xff]
      %v344 = vld [vmem:[%s342 + $0x8] sm:$0xff]
      %v345 = vld [vmem:[%s342 + $0x10] sm:$0xff]
      %v346 = vld [vmem:[%s342 + $0x18] sm:$0xff]
      %351 = vrot.lane.b32.xlu0 %v343, 8
      %v352 = vpop.permute.xlu0 %351
      %353 = vrot.lane.b32.xlu0 %v344, 8
      %v354 = vpop.permute.xlu0 %353
      %355 = vrot.lane.b32.xlu0 %v345, 8
      %v356 = vpop.permute.xlu0 %355
      %357 = vrot.lane.b32.xlu0 %v346, 8
      %v358 = vpop.permute.xlu0 %357
      %vm363 = vcmask 130112
      %364 = vst.msk [vmem:[#allocation2 + $0x4] sm:$0xff] %vm363, %v352
      %365 = vst.msk [vmem:[#allocation2 + $0xc] sm:$0xff] %vm363, %v354
      %366 = vst.msk [vmem:[#allocation2 + $0x14] sm:$0xff] %vm363, %v356
      %367 = vst.msk [vmem:[#allocation2 + $0x1c] sm:$0xff] %vm363, %v358
      %vm368 = vcmask 68672
      %369 = vst.msk [vmem:[#allocation2] sm:$0xf] %vm368, 0.0
      %v370 = vld [vmem:[%s342 + $0x1c] sm:$0xf]
      %372 = vrot.lane.b32.xlu0 %v370, 9
      %v373 = vpop.permute.xlu0 %372
      %vm375 = vcmask 126024
      %376 = vst.msk [vmem:[#allocation2] sm:$0xf] %vm375, %v373
      %v377 = vld [vmem:[%s342] sm:$0x3]
      %379 = vrot.lane.b32.xlu0 %v377, 7
      %v380 = vpop.permute.xlu0 %379
      %vm382 = vcmask 115776
      %383 = vst.msk [vmem:[#allocation2 + $0x24] sm:$0x3] %vm382, %v380
      %vm384 = vcmask 124024
      %385 = vst.msk [vmem:[#allocation2 + $0x24] sm:$0x3] %vm384, 0.0
      %v386 = vld [vmem:[%s1] sm:$0x3]
      %v387 = vld [vmem:[%s7] sm:$0xf]
      %s388 = scalar_lea.vmem %s7, 64
      %v389 = vld [vmem:[%s388] sm:$0xf]
      %v390 = vld [vmem:[#allocation2] sm:$0xff]
      %v391 = vld [vmem:[#allocation2 + $0x8] sm:$0x3]
      %v392 = vpack.c.bf16 %v391, %v390
      %vm393 = vcmask 80896
      %v395 = vsel %vm393, %v386, 0
      %vm397 = vcmask 1044480
      %v399 = vsel %vm397, %v392, 0
      %401 = vmatprep.subr.bf16.mxu0 0
      %402 = vmatpush1.bf16.msra.mxu0 %v399
      %403 = vmatprep.subr.bf16.mxu0 0
      %404 = vmatpush1.bf16.msra.mxu0 0
      %405 = vmatprep.subr.bf16.mxu0 0
      %406 = vmatpush1.bf16.msra.mxu0 0
      %407 = vmatprep.subr.bf16.mxu0 0
      %408 = vmatpush1.bf16.msra.mxu0 0
      %409 = vmatprep.subr.bf16.mxu0 0
      %410 = vmatpush1.bf16.msra.mxu0 0
      %411 = vmatprep.subr.bf16.mxu0 0
      %412 = vmatpush1.bf16.msra.mxu0 0
      %413 = vmatprep.subr.bf16.mxu0 0
      %414 = vmatpush1.bf16.msra.mxu0 0
      %415 = vmatprep.subr.bf16.mxu0 0
      %416 = vmatpush1.bf16.msra.mxu0 0
      %417 = vmatprep.subr.bf16.mxu0 0
      %418 = vmatpush1.bf16.msra.mxu0 0
      %419 = vmatprep.subr.bf16.mxu0 0
      %420 = vmatpush1.bf16.msra.mxu0 0
      %421 = vmatprep.subr.bf16.mxu0 0
      %422 = vmatpush1.bf16.msra.mxu0 0
      %423 = vmatprep.subr.bf16.mxu0 0
      %424 = vmatpush1.bf16.msra.mxu0 0
      %425 = vmatprep.subr.bf16.mxu0 0
      %426 = vmatpush1.bf16.msra.mxu0 0
      %427 = vmatprep.subr.bf16.mxu0 0
      %428 = vmatpush1.bf16.msra.mxu0 0
      %429 = vmatprep.subr.bf16.mxu0 0
      %430 = vmatpush1.bf16.msra.mxu0 0
      %431 = vmatprep.subr.bf16.mxu0 0
      %432 = vmatpush1.bf16.msra.mxu0 0
      %433 = vmatprep.mubr.bf16.mxu0 0
      %434 = vmatmul.mubr.bf16.gmra.mrb[0].mxu0 %v395
      %v435 = vpop.f32.mrb[0].mxu0
      %v436 = vadd.f32 0.0, %v435
      %v437 = vpop.f32.mrb[0].mxu0
      %v438 = vpop.f32.mrb[0].mxu0
      %v439 = vpop.f32.mrb[0].mxu0
      %440 = vdwg.mxu0
      %442 = vset.pattern.permute.xlu0 0
      %443 = vperm.xlu0 %442, %v387
      %v444 = vpop.permute.xlu0 %443
      %v446 = vmul.f32 %v436, %v444
      %448 = vset.pattern.permute.xlu0 0
      %449 = vperm.xlu0 %448, %v389
      %v450 = vpop.permute.xlu0 %449
      %v452 = vadd.f32 %v446, %v450
      %v453 = vxor.u32 %v452, 2147483648
      %v454 = vmul.f32 %v453, 1.442695
      %v455 = vpow.pop %v454
      %v456 = vadd.f32 %v455, 1.0
      %v457 = vrcp.pop %v456
      %v458 = vmul.f32 1.0, %v457
      %v459 = vmul.f32 %v452, %v458
      %vm460 = vcmask 125952
      %461 = vst.msk [vmem:[#allocation3 + $0x8] sm:$0xf] %vm460, %v459
      %463 = vrot.lane.b32.xlu0 %v459, 127
      %v464 = vpop.permute.xlu0 %463
      %vm466 = vcmask 52224
      %467 = vst.msk [vmem:[#allocation3 + $0x28] sm:$0xf] %vm466, %v464
      %vm468 = vcmask 60472
      %469 = vst.msk [vmem:[#allocation3 + $0x28] sm:$0xf] %vm468, 0.0
      %vm470 = vcmask 117824
      %471 = vst.msk [vmem:[#allocation3 + $0x28] sm:$0xf] %vm470, %v464
      %vm472 = vcmask 126072
      %473 = vst.msk [vmem:[#allocation3 + $0x28] sm:$0xf] %vm472, 0.0
      %v474 = vld [vmem:[#allocation2 + $0x4] sm:$0xff]
      %v475 = vld [vmem:[#allocation2 + $0xc] sm:$0x3]
      %v476 = vpack.c.bf16 %v475, %v474
      %v478 = vsel %vm397, %v476, 0
      %480 = vmatprep.subr.bf16.mxu0 0
      %481 = vmatpush1.bf16.msra.mxu0 %v478
      %482 = vmatprep.subr.bf16.mxu0 0
      %483 = vmatpush1.bf16.msra.mxu0 0
      %484 = vmatprep.subr.bf16.mxu0 0
      %485 = vmatpush1.bf16.msra.mxu0 0
      %486 = vmatprep.subr.bf16.mxu0 0
      %487 = vmatpush1.bf16.msra.mxu0 0
      %488 = vmatprep.subr.bf16.mxu0 0
      %489 = vmatpush1.bf16.msra.mxu0 0
      %490 = vmatprep.subr.bf16.mxu0 0
      %491 = vmatpush1.bf16.msra.mxu0 0
      %492 = vmatprep.subr.bf16.mxu0 0
      %493 = vmatpush1.bf16.msra.mxu0 0
      %494 = vmatprep.subr.bf16.mxu0 0
      %495 = vmatpush1.bf16.msra.mxu0 0
      %496 = vmatprep.subr.bf16.mxu0 0
      %497 = vmatpush1.bf16.msra.mxu0 0
      %498 = vmatprep.subr.bf16.mxu0 0
      %499 = vmatpush1.bf16.msra.mxu0 0
      %500 = vmatprep.subr.bf16.mxu0 0
      %501 = vmatpush1.bf16.msra.mxu0 0
      %502 = vmatprep.subr.bf16.mxu0 0
      %503 = vmatpush1.bf16.msra.mxu0 0
      %504 = vmatprep.subr.bf16.mxu0 0
      %505 = vmatpush1.bf16.msra.mxu0 0
      %506 = vmatprep.subr.bf16.mxu0 0
      %507 = vmatpush1.bf16.msra.mxu0 0
      %508 = vmatprep.subr.bf16.mxu0 0
      %509 = vmatpush1.bf16.msra.mxu0 0
      %510 = vmatprep.subr.bf16.mxu0 0
      %511 = vmatpush1.bf16.msra.mxu0 0
      %512 = vmatprep.mubr.bf16.mxu0 0
      %513 = vmatmul.mubr.bf16.gmra.mrb[0].mxu0 %v395
      %v514 = vpop.f32.mrb[0].mxu0
      %v515 = vadd.f32 0.0, %v514
      %v516 = vpop.f32.mrb[0].mxu0
      %v517 = vpop.f32.mrb[0].mxu0
      %v518 = vpop.f32.mrb[0].mxu0
      %519 = vdwg.mxu0
      %v520 = vmul.f32 %v515, %v444
      %v521 = vadd.f32 %v520, %v450
      %v522 = vxor.u32 %v521, 2147483648
      %v523 = vmul.f32 %v522, 1.442695
      %v524 = vpow.pop %v523
      %v525 = vadd.f32 %v524, 1.0
      %v526 = vrcp.pop %v525
      %v527 = vmul.f32 1.0, %v526
      %v528 = vmul.f32 %v521, %v527
      %529 = vst.msk [vmem:[#allocation3 + $0xc] sm:$0xf] %vm460, %v528
      %v530 = vld [vmem:[#allocation2 + $0x8] sm:$0xff]
      %v531 = vld [vmem:[#allocation2 + $0x10] sm:$0x3]
      %v532 = vpack.c.bf16 %v531, %v530
      %v534 = vsel %vm397, %v532, 0
      %536 = vmatprep.subr.bf16.mxu0 0
      %537 = vmatpush1.bf16.msra.mxu0 %v534
      %538 = vmatprep.subr.bf16.mxu0 0
      %539 = vmatpush1.bf16.msra.mxu0 0
      %540 = vmatprep.subr.bf16.mxu0 0
      %541 = vmatpush1.bf16.msra.mxu0 0
      %542 = vmatprep.subr.bf16.mxu0 0
      %543 = vmatpush1.bf16.msra.mxu0 0
      %544 = vmatprep.subr.bf16.mxu0 0
      %545 = vmatpush1.bf16.msra.mxu0 0
      %546 = vmatprep.subr.bf16.mxu0 0
      %547 = vmatpush1.bf16.msra.mxu0 0
      %548 = vmatprep.subr.bf16.mxu0 0
      %549 = vmatpush1.bf16.msra.mxu0 0
      %550 = vmatprep.subr.bf16.mxu0 0
      %551 = vmatpush1.bf16.msra.mxu0 0
      %552 = vmatprep.subr.bf16.mxu0 0
      %553 = vmatpush1.bf16.msra.mxu0 0
      %554 = vmatprep.subr.bf16.mxu0 0
      %555 = vmatpush1.bf16.msra.mxu0 0
      %556 = vmatprep.subr.bf16.mxu0 0
      %557 = vmatpush1.bf16.msra.mxu0 0
      %558 = vmatprep.subr.bf16.mxu0 0
      %559 = vmatpush1.bf16.msra.mxu0 0
      %560 = vmatprep.subr.bf16.mxu0 0
      %561 = vmatpush1.bf16.msra.mxu0 0
      %562 = vmatprep.subr.bf16.mxu0 0
      %563 = vmatpush1.bf16.msra.mxu0 0
      %564 = vmatprep.subr.bf16.mxu0 0
      %565 = vmatpush1.bf16.msra.mxu0 0
      %566 = vmatprep.subr.bf16.mxu0 0
      %567 = vmatpush1.bf16.msra.mxu0 0
      %568 = vmatprep.mubr.bf16.mxu0 0
      %569 = vmatmul.mubr.bf16.gmra.mrb[0].mxu0 %v395
      %v570 = vpop.f32.mrb[0].mxu0
      %v571 = vadd.f32 0.0, %v570
      %v572 = vpop.f32.mrb[0].mxu0
      %v573 = vpop.f32.mrb[0].mxu0
      %v574 = vpop.f32.mrb[0].mxu0
      %575 = vdwg.mxu0
      %v576 = vmul.f32 %v571, %v444
      %v577 = vadd.f32 %v576, %v450
      %v578 = vxor.u32 %v577, 2147483648
      %v579 = vmul.f32 %v578, 1.442695
      %v580 = vpow.pop %v579
      %v581 = vadd.f32 %v580, 1.0
      %v582 = vrcp.pop %v581
      %v583 = vmul.f32 1.0, %v582
      %v584 = vmul.f32 %v577, %v583
      %585 = vst.msk [vmem:[#allocation3 + $0x10] sm:$0xf] %vm460, %v584
      %v586 = vld [vmem:[#allocation2 + $0xc] sm:$0xff]
      %v587 = vld [vmem:[#allocation2 + $0x14] sm:$0x3]
      %v588 = vpack.c.bf16 %v587, %v586
      %v590 = vsel %vm397, %v588, 0
      %592 = vmatprep.subr.bf16.mxu0 0
      %593 = vmatpush1.bf16.msra.mxu0 %v590
      %594 = vmatprep.subr.bf16.mxu0 0
      %595 = vmatpush1.bf16.msra.mxu0 0
      %596 = vmatprep.subr.bf16.mxu0 0
      %597 = vmatpush1.bf16.msra.mxu0 0
      %598 = vmatprep.subr.bf16.mxu0 0
      %599 = vmatpush1.bf16.msra.mxu0 0
      %600 = vmatprep.subr.bf16.mxu0 0
      %601 = vmatpush1.bf16.msra.mxu0 0
      %602 = vmatprep.subr.bf16.mxu0 0
      %603 = vmatpush1.bf16.msra.mxu0 0
      %604 = vmatprep.subr.bf16.mxu0 0
      %605 = vmatpush1.bf16.msra.mxu0 0
      %606 = vmatprep.subr.bf16.mxu0 0
      %607 = vmatpush1.bf16.msra.mxu0 0
      %608 = vmatprep.subr.bf16.mxu0 0
      %609 = vmatpush1.bf16.msra.mxu0 0
      %610 = vmatprep.subr.bf16.mxu0 0
      %611 = vmatpush1.bf16.msra.mxu0 0
      %612 = vmatprep.subr.bf16.mxu0 0
      %613 = vmatpush1.bf16.msra.mxu0 0
      %614 = vmatprep.subr.bf16.mxu0 0
      %615 = vmatpush1.bf16.msra.mxu0 0
      %616 = vmatprep.subr.bf16.mxu0 0
      %617 = vmatpush1.bf16.msra.mxu0 0
      %618 = vmatprep.subr.bf16.mxu0 0
      %619 = vmatpush1.bf16.msra.mxu0 0
      %620 = vmatprep.subr.bf16.mxu0 0
      %621 = vmatpush1.bf16.msra.mxu0 0
      %622 = vmatprep.subr.bf16.mxu0 0
      %623 = vmatpush1.bf16.msra.mxu0 0
      %624 = vmatprep.mubr.bf16.mxu0 0
      %625 = vmatmul.mubr.bf16.gmra.mrb[0].mxu0 %v395
      %v626 = vpop.f32.mrb[0].mxu0
      %v627 = vadd.f32 0.0, %v626
      %v628 = vpop.f32.mrb[0].mxu0
      %v629 = vpop.f32.mrb[0].mxu0
      %v630 = vpop.f32.mrb[0].mxu0
      %631 = vdwg.mxu0
      %v632 = vmul.f32 %v627, %v444
      %v633 = vadd.f32 %v632, %v450
      %v634 = vxor.u32 %v633, 2147483648
      %v635 = vmul.f32 %v634, 1.442695
      %v636 = vpow.pop %v635
      %v637 = vadd.f32 %v636, 1.0
      %v638 = vrcp.pop %v637
      %v639 = vmul.f32 1.0, %v638
      %v640 = vmul.f32 %v633, %v639
      %641 = vst.msk [vmem:[#allocation3 + $0x14] sm:$0xf] %vm460, %v640
      %v642 = vld [vmem:[#allocation2 + $0x10] sm:$0xff]
      %v643 = vld [vmem:[#allocation2 + $0x18] sm:$0x3]
      %v644 = vpack.c.bf16 %v643, %v642
      %v646 = vsel %vm397, %v644, 0
      %648 = vmatprep.subr.bf16.mxu0 0
      %649 = vmatpush1.bf16.msra.mxu0 %v646
      %650 = vmatprep.subr.bf16.mxu0 0
      %651 = vmatpush1.bf16.msra.mxu0 0
      %652 = vmatprep.subr.bf16.mxu0 0
      %653 = vmatpush1.bf16.msra.mxu0 0
      %654 = vmatprep.subr.bf16.mxu0 0
      %655 = vmatpush1.bf16.msra.mxu0 0
      %656 = vmatprep.subr.bf16.mxu0 0
      %657 = vmatpush1.bf16.msra.mxu0 0
      %658 = vmatprep.subr.bf16.mxu0 0
      %659 = vmatpush1.bf16.msra.mxu0 0
      %660 = vmatprep.subr.bf16.mxu0 0
      %661 = vmatpush1.bf16.msra.mxu0 0
      %662 = vmatprep.subr.bf16.mxu0 0
      %663 = vmatpush1.bf16.msra.mxu0 0
      %664 = vmatprep.subr.bf16.mxu0 0
      %665 = vmatpush1.bf16.msra.mxu0 0
      %666 = vmatprep.subr.bf16.mxu0 0
      %667 = vmatpush1.bf16.msra.mxu0 0
      %668 = vmatprep.subr.bf16.mxu0 0
      %669 = vmatpush1.bf16.msra.mxu0 0
      %670 = vmatprep.subr.bf16.mxu0 0
      %671 = vmatpush1.bf16.msra.mxu0 0
      %672 = vmatprep.subr.bf16.mxu0 0
      %673 = vmatpush1.bf16.msra.mxu0 0
      %674 = vmatprep.subr.bf16.mxu0 0
      %675 = vmatpush1.bf16.msra.mxu0 0
      %676 = vmatprep.subr.bf16.mxu0 0
      %677 = vmatpush1.bf16.msra.mxu0 0
      %678 = vmatprep.subr.bf16.mxu0 0
      %679 = vmatpush1.bf16.msra.mxu0 0
      %680 = vmatprep.mubr.bf16.mxu0 0
      %681 = vmatmul.mubr.bf16.gmra.mrb[0].mxu0 %v395
      %v682 = vpop.f32.mrb[0].mxu0
      %v683 = vadd.f32 0.0, %v682
      %v684 = vpop.f32.mrb[0].mxu0
      %v685 = vpop.f32.mrb[0].mxu0
      %v686 = vpop.f32.mrb[0].mxu0
      %687 = vdwg.mxu0
      %v688 = vmul.f32 %v683, %v444
      %v689 = vadd.f32 %v688, %v450
      %v690 = vxor.u32 %v689, 2147483648
      %v691 = vmul.f32 %v690, 1.442695
      %v692 = vpow.pop %v691
      %v693 = vadd.f32 %v692, 1.0
      %v694 = vrcp.pop %v693
      %v695 = vmul.f32 1.0, %v694
      %v696 = vmul.f32 %v689, %v695
      %697 = vst.msk [vmem:[#allocation3 + $0x18] sm:$0xf] %vm460, %v696
      %v698 = vld [vmem:[#allocation2 + $0x14] sm:$0xff]
      %v699 = vld [vmem:[#allocation2 + $0x1c] sm:$0x3]
      %v700 = vpack.c.bf16 %v699, %v698
      %v702 = vsel %vm397, %v700, 0
      %704 = vmatprep.subr.bf16.mxu0 0
      %705 = vmatpush1.bf16.msra.mxu0 %v702
      %706 = vmatprep.subr.bf16.mxu0 0
      %707 = vmatpush1.bf16.msra.mxu0 0
      %708 = vmatprep.subr.bf16.mxu0 0
      %709 = vmatpush1.bf16.msra.mxu0 0
      %710 = vmatprep.subr.bf16.mxu0 0
      %711 = vmatpush1.bf16.msra.mxu0 0
      %712 = vmatprep.subr.bf16.mxu0 0
      %713 = vmatpush1.bf16.msra.mxu0 0
      %714 = vmatprep.subr.bf16.mxu0 0
      %715 = vmatpush1.bf16.msra.mxu0 0
      %716 = vmatprep.subr.bf16.mxu0 0
      %717 = vmatpush1.bf16.msra.mxu0 0
      %718 = vmatprep.subr.bf16.mxu0 0
      %719 = vmatpush1.bf16.msra.mxu0 0
      %720 = vmatprep.subr.bf16.mxu0 0
      %721 = vmatpush1.bf16.msra.mxu0 0
      %722 = vmatprep.subr.bf16.mxu0 0
      %723 = vmatpush1.bf16.msra.mxu0 0
      %724 = vmatprep.subr.bf16.mxu0 0
      %725 = vmatpush1.bf16.msra.mxu0 0
      %726 = vmatprep.subr.bf16.mxu0 0
      %727 = vmatpush1.bf16.msra.mxu0 0
      %728 = vmatprep.subr.bf16.mxu0 0
      %729 = vmatpush1.bf16.msra.mxu0 0
      %730 = vmatprep.subr.bf16.mxu0 0
      %731 = vmatpush1.bf16.msra.mxu0 0
      %732 = vmatprep.subr.bf16.mxu0 0
      %733 = vmatpush1.bf16.msra.mxu0 0
      %734 = vmatprep.subr.bf16.mxu0 0
      %735 = vmatpush1.bf16.msra.mxu0 0
      %736 = vmatprep.mubr.bf16.mxu0 0
      %737 = vmatmul.mubr.bf16.gmra.mrb[0].mxu0 %v395
      %v738 = vpop.f32.mrb[0].mxu0
      %v739 = vadd.f32 0.0, %v738
      %v740 = vpop.f32.mrb[0].mxu0
      %v741 = vpop.f32.mrb[0].mxu0
      %v742 = vpop.f32.mrb[0].mxu0
      %743 = vdwg.mxu0
      %v744 = vmul.f32 %v739, %v444
      %v745 = vadd.f32 %v744, %v450
      %v746 = vxor.u32 %v745, 2147483648
      %v747 = vmul.f32 %v746, 1.442695
      %v748 = vpow.pop %v747
      %v749 = vadd.f32 %v748, 1.0
      %v750 = vrcp.pop %v749
      %v751 = vmul.f32 1.0, %v750
      %v752 = vmul.f32 %v745, %v751
      %753 = vst.msk [vmem:[#allocation3 + $0x1c] sm:$0xf] %vm460, %v752
      %v754 = vld [vmem:[#allocation2 + $0x18] sm:$0xff]
      %v755 = vld [vmem:[#allocation2 + $0x20] sm:$0x3]
      %v756 = vpack.c.bf16 %v755, %v754
      %v758 = vsel %vm397, %v756, 0
      %760 = vmatprep.subr.bf16.mxu0 0
      %761 = vmatpush1.bf16.msra.mxu0 %v758
      %762 = vmatprep.subr.bf16.mxu0 0
      %763 = vmatpush1.bf16.msra.mxu0 0
      %764 = vmatprep.subr.bf16.mxu0 0
      %765 = vmatpush1.bf16.msra.mxu0 0
      %766 = vmatprep.subr.bf16.mxu0 0
      %767 = vmatpush1.bf16.msra.mxu0 0
      %768 = vmatprep.subr.bf16.mxu0 0
      %769 = vmatpush1.bf16.msra.mxu0 0
      %770 = vmatprep.subr.bf16.mxu0 0
      %771 = vmatpush1.bf16.msra.mxu0 0
      %772 = vmatprep.subr.bf16.mxu0 0
      %773 = vmatpush1.bf16.msra.mxu0 0
      %774 = vmatprep.subr.bf16.mxu0 0
      %775 = vmatpush1.bf16.msra.mxu0 0
      %776 = vmatprep.subr.bf16.mxu0 0
      %777 = vmatpush1.bf16.msra.mxu0 0
      %778 = vmatprep.subr.bf16.mxu0 0
      %779 = vmatpush1.bf16.msra.mxu0 0
      %780 = vmatprep.subr.bf16.mxu0 0
      %781 = vmatpush1.bf16.msra.mxu0 0
      %782 = vmatprep.subr.bf16.mxu0 0
      %783 = vmatpush1.bf16.msra.mxu0 0
      %784 = vmatprep.subr.bf16.mxu0 0
      %785 = vmatpush1.bf16.msra.mxu0 0
      %786 = vmatprep.subr.bf16.mxu0 0
      %787 = vmatpush1.bf16.msra.mxu0 0
      %788 = vmatprep.subr.bf16.mxu0 0
      %789 = vmatpush1.bf16.msra.mxu0 0
      %790 = vmatprep.subr.bf16.mxu0 0
      %791 = vmatpush1.bf16.msra.mxu0 0
      %792 = vmatprep.mubr.bf16.mxu0 0
      %793 = vmatmul.mubr.bf16.gmra.mrb[0].mxu0 %v395
      %v794 = vpop.f32.mrb[0].mxu0
      %v795 = vadd.f32 0.0, %v794
      %v796 = vpop.f32.mrb[0].mxu0
      %v797 = vpop.f32.mrb[0].mxu0
      %v798 = vpop.f32.mrb[0].mxu0
      %799 = vdwg.mxu0
      %v800 = vmul.f32 %v795, %v444
      %v801 = vadd.f32 %v800, %v450
      %v802 = vxor.u32 %v801, 2147483648
      %v803 = vmul.f32 %v802, 1.442695
      %v804 = vpow.pop %v803
      %v805 = vadd.f32 %v804, 1.0
      %v806 = vrcp.pop %v805
      %v807 = vmul.f32 1.0, %v806
      %v808 = vmul.f32 %v801, %v807
      %809 = vst.msk [vmem:[#allocation3 + $0x20] sm:$0xf] %vm460, %v808
      %810 = vst.msk [vmem:[#allocation3] sm:$0xf] %vm324, 0.0
      %812 = vrot.lane.b32.xlu0 %v808, 1
      %v813 = vpop.permute.xlu0 %812
      %815 = vst.msk [vmem:[#allocation3] sm:$0xf] %vm331, %v813
      %816 = vst.msk [vmem:[#allocation3] sm:$0xf] %vm368, 0.0
      %817 = vst.msk [vmem:[#allocation3] sm:$0xf] %vm375, %v813
      %v818 = vld [vmem:[#allocation2 + $0x1c] sm:$0xff]
      %v819 = vld [vmem:[#allocation2 + $0x24] sm:$0x3]
      %v820 = vpack.c.bf16 %v819, %v818
      %v822 = vsel %vm397, %v820, 0
      %824 = vmatprep.subr.bf16.mxu0 0
      %825 = vmatpush1.bf16.msra.mxu0 %v822
      %826 = vmatprep.subr.bf16.mxu0 0
      %827 = vmatpush1.bf16.msra.mxu0 0
      %828 = vmatprep.subr.bf16.mxu0 0
      %829 = vmatpush1.bf16.msra.mxu0 0
      %830 = vmatprep.subr.bf16.mxu0 0
      %831 = vmatpush1.bf16.msra.mxu0 0
      %832 = vmatprep.subr.bf16.mxu0 0
      %833 = vmatpush1.bf16.msra.mxu0 0
      %834 = vmatprep.subr.bf16.mxu0 0
      %835 = vmatpush1.bf16.msra.mxu0 0
      %836 = vmatprep.subr.bf16.mxu0 0
      %837 = vmatpush1.bf16.msra.mxu0 0
      %838 = vmatprep.subr.bf16.mxu0 0
      %839 = vmatpush1.bf16.msra.mxu0 0
      %840 = vmatprep.subr.bf16.mxu0 0
      %841 = vmatpush1.bf16.msra.mxu0 0
      %842 = vmatprep.subr.bf16.mxu0 0
      %843 = vmatpush1.bf16.msra.mxu0 0
      %844 = vmatprep.subr.bf16.mxu0 0
      %845 = vmatpush1.bf16.msra.mxu0 0
      %846 = vmatprep.subr.bf16.mxu0 0
      %847 = vmatpush1.bf16.msra.mxu0 0
      %848 = vmatprep.subr.bf16.mxu0 0
      %849 = vmatpush1.bf16.msra.mxu0 0
      %850 = vmatprep.subr.bf16.mxu0 0
      %851 = vmatpush1.bf16.msra.mxu0 0
      %852 = vmatprep.subr.bf16.mxu0 0
      %853 = vmatpush1.bf16.msra.mxu0 0
      %854 = vmatprep.subr.bf16.mxu0 0
      %855 = vmatpush1.bf16.msra.mxu0 0
      %856 = vmatprep.mubr.bf16.mxu0 0
      %857 = vmatmul.mubr.bf16.gmra.mrb[0].mxu0 %v395
      %v858 = vpop.f32.mrb[0].mxu0
      %v859 = vadd.f32 0.0, %v858
      %v860 = vpop.f32.mrb[0].mxu0
      %v861 = vpop.f32.mrb[0].mxu0
      %v862 = vpop.f32.mrb[0].mxu0
      %863 = vdwg.mxu0
      %v864 = vmul.f32 %v859, %v444
      %v865 = vadd.f32 %v864, %v450
      %v866 = vxor.u32 %v865, 2147483648
      %v867 = vmul.f32 %v866, 1.442695
      %v868 = vpow.pop %v867
      %v869 = vadd.f32 %v868, 1.0
      %v870 = vrcp.pop %v869
      %v871 = vmul.f32 1.0, %v870
      %v872 = vmul.f32 %v865, %v871
      %873 = vst.msk [vmem:[#allocation3 + $0x24] sm:$0xf] %vm460, %v872
      %874 = vst.msk [vmem:[#allocation3 + $0x4] sm:$0xf] %vm324, 0.0
      %876 = vrot.lane.b32.xlu0 %v872, 1
      %v877 = vpop.permute.xlu0 %876
      %879 = vst.msk [vmem:[#allocation3 + $0x4] sm:$0xf] %vm331, %v877
      %880 = vst.msk [vmem:[#allocation3 + $0x4] sm:$0xf] %vm368, 0.0
      %881 = vst.msk [vmem:[#allocation3 + $0x4] sm:$0xf] %vm375, %v877
      %v882 = vld [vmem:[%s2] sm:$0xf]
      %v883 = vld [vmem:[%s7 + $0x4] sm:$0xff]
      %v884 = vld [vmem:[%s388 + $0x4] sm:$0xff]
      %v885 = vld [vmem:[#allocation3] sm:$0xff]
      %v886 = vld [vmem:[#allocation3 + $0x8] sm:$0xff]
      %v887 = vld [vmem:[#allocation3 + $0x10] sm:$0xf]
      %v888 = vpack.c.bf16 %v886, %v885
      %v889 = vpack.c.bf16 %v887, %v887
      %vm890 = vcmask 162816
      %v892 = vsel %vm890, %v882, 0
      %vm894 = vcmask 1041408
      %v896 = vsel %vm894, %v889, 0
      %898 = vmatprep.subr.bf16.mxu0 0
      %899 = vmatpush1.bf16.msra.mxu0 %v888
      %900 = vmatprep.subr.bf16.mxu0 0
      %901 = vmatpush1.bf16.msra.mxu0 %v896
      %902 = vmatprep.subr.bf16.mxu0 0
      %903 = vmatpush1.bf16.msra.mxu0 0
      %904 = vmatprep.subr.bf16.mxu0 0
      %905 = vmatpush1.bf16.msra.mxu0 0
      %906 = vmatprep.subr.bf16.mxu0 0
      %907 = vmatpush1.bf16.msra.mxu0 0
      %908 = vmatprep.subr.bf16.mxu0 0
      %909 = vmatpush1.bf16.msra.mxu0 0
      %910 = vmatprep.subr.bf16.mxu0 0
      %911 = vmatpush1.bf16.msra.mxu0 0
      %912 = vmatprep.subr.bf16.mxu0 0
      %913 = vmatpush1.bf16.msra.mxu0 0
      %914 = vmatprep.subr.bf16.mxu0 0
      %915 = vmatpush1.bf16.msra.mxu0 0
      %916 = vmatprep.subr.bf16.mxu0 0
      %917 = vmatpush1.bf16.msra.mxu0 0
      %918 = vmatprep.subr.bf16.mxu0 0
      %919 = vmatpush1.bf16.msra.mxu0 0
      %920 = vmatprep.subr.bf16.mxu0 0
      %921 = vmatpush1.bf16.msra.mxu0 0
      %922 = vmatprep.subr.bf16.mxu0 0
      %923 = vmatpush1.bf16.msra.mxu0 0
      %924 = vmatprep.subr.bf16.mxu0 0
      %925 = vmatpush1.bf16.msra.mxu0 0
      %926 = vmatprep.subr.bf16.mxu0 0
      %927 = vmatpush1.bf16.msra.mxu0 0
      %928 = vmatprep.subr.bf16.mxu0 0
      %929 = vmatpush1.bf16.msra.mxu0 0
      %930 = vmatprep.mubr.bf16.mxu0 0
      %931 = vmatmul.mubr.bf16.gmra.mrb[0].mxu0 %v892
      %v932 = vpop.f32.mrb[0].mxu0
      %v933 = vadd.f32 0.0, %v932
      %v934 = vpop.f32.mrb[0].mxu0
      %v935 = vpop.f32.mrb[0].mxu0
      %v936 = vpop.f32.mrb[0].mxu0
      %937 = vdwg.mxu0
      %939 = vset.pattern.permute.xlu0 0
      %940 = vperm.xlu0 %939, %v883
      %v941 = vpop.permute.xlu0 %940
      %v943 = vmul.f32 %v933, %v941
      %945 = vset.pattern.permute.xlu0 0
      %946 = vperm.xlu0 %945, %v884
      %v947 = vpop.permute.xlu0 %946
      %v949 = vadd.f32 %v943, %v947
      %v950 = vxor.u32 %v949, 2147483648
      %v951 = vmul.f32 %v950, 1.442695
      %v952 = vpow.pop %v951
      %v953 = vadd.f32 %v952, 1.0
      %v954 = vrcp.pop %v953
      %v955 = vmul.f32 1.0, %v954
      %v956 = vmul.f32 %v949, %v955
      %vm957 = vcmask 130048
      %958 = vst.msk [vmem:[#allocation4 + $0x10] sm:$0xff] %vm957, %v956
      %960 = vrot.lane.b32.xlu0 %v956, 127
      %v961 = vpop.permute.xlu0 %960
      %vm963 = vcmask 56320
      %964 = vst.msk [vmem:[#allocation4 + $0x30] sm:$0xff] %vm963, %v961
      %vm965 = vcmask 64568
      %966 = vst.msk [vmem:[#allocation4 + $0x30] sm:$0xff] %vm965, 0.0
      %vm967 = vcmask 121920
      %968 = vst.msk [vmem:[#allocation4 + $0x30] sm:$0xff] %vm967, %v961
      %vm969 = vcmask 130168
      %970 = vst.msk [vmem:[#allocation4 + $0x30] sm:$0xff] %vm969, 0.0
      %v971 = vld [vmem:[#allocation3 + $0x8] sm:$0xff]
      %v972 = vld [vmem:[#allocation3 + $0x10] sm:$0xff]
      %v973 = vld [vmem:[#allocation3 + $0x18] sm:$0xf]
      %v974 = vpack.c.bf16 %v972, %v971
      %v975 = vpack.c.bf16 %v973, %v973
      %v977 = vsel %vm894, %v975, 0
      %979 = vmatprep.subr.bf16.mxu0 0
      %980 = vmatpush1.bf16.msra.mxu0 %v974
      %981 = vmatprep.subr.bf16.mxu0 0
      %982 = vmatpush1.bf16.msra.mxu0 %v977
      %983 = vmatprep.subr.bf16.mxu0 0
      %984 = vmatpush1.bf16.msra.mxu0 0
      %985 = vmatprep.subr.bf16.mxu0 0
      %986 = vmatpush1.bf16.msra.mxu0 0
      %987 = vmatprep.subr.bf16.mxu0 0
      %988 = vmatpush1.bf16.msra.mxu0 0
      %989 = vmatprep.subr.bf16.mxu0 0
      %990 = vmatpush1.bf16.msra.mxu0 0
      %991 = vmatprep.subr.bf16.mxu0 0
      %992 = vmatpush1.bf16.msra.mxu0 0
      %993 = vmatprep.subr.bf16.mxu0 0
      %994 = vmatpush1.bf16.msra.mxu0 0
      %995 = vmatprep.subr.bf16.mxu0 0
      %996 = vmatpush1.bf16.msra.mxu0 0
      %997 = vmatprep.subr.bf16.mxu0 0
      %998 = vmatpush1.bf16.msra.mxu0 0
      %999 = vmatprep.subr.bf16.mxu0 0
      %1000 = vmatpush1.bf16.msra.mxu0 0
      %1001 = vmatprep.subr.bf16.mxu0 0
      %1002 = vmatpush1.bf16.msra.mxu0 0
      %1003 = vmatprep.subr.bf16.mxu0 0
      %1004 = vmatpush1.bf16.msra.mxu0 0
      %1005 = vmatprep.subr.bf16.mxu0 0
      %1006 = vmatpush1.bf16.msra.mxu0 0
      %1007 = vmatprep.subr.bf16.mxu0 0
      %1008 = vmatpush1.bf16.msra.mxu0 0
      %1009 = vmatprep.subr.bf16.mxu0 0
      %1010 = vmatpush1.bf16.msra.mxu0 0
      %1011 = vmatprep.mubr.bf16.mxu0 0
      %1012 = vmatmul.mubr.bf16.gmra.mrb[0].mxu0 %v892
      %v1013 = vpop.f32.mrb[0].mxu0
      %v1014 = vadd.f32 0.0, %v1013
      %v1015 = vpop.f32.mrb[0].mxu0
      %v1016 = vpop.f32.mrb[0].mxu0
      %v1017 = vpop.f32.mrb[0].mxu0
      %1018 = vdwg.mxu0
      %v1019 = vmul.f32 %v1014, %v941
      %v1020 = vadd.f32 %v1019, %v947
      %v1021 = vxor.u32 %v1020, 2147483648
      %v1022 = vmul.f32 %v1021, 1.442695
      %v1023 = vpow.pop %v1022
      %v1024 = vadd.f32 %v1023, 1.0
      %v1025 = vrcp.pop %v1024
      %v1026 = vmul.f32 1.0, %v1025
      %v1027 = vmul.f32 %v1020, %v1026
      %1028 = vst.msk [vmem:[#allocation4 + $0x18] sm:$0xff] %vm957, %v1027
      %v1029 = vld [vmem:[#allocation3 + $0x10] sm:$0xff]
      %v1030 = vld [vmem:[#allocation3 + $0x18] sm:$0xff]
      %v1031 = vld [vmem:[#allocation3 + $0x20] sm:$0xf]
      %v1032 = vpack.c.bf16 %v1030, %v1029
      %v1033 = vpack.c.bf16 %v1031, %v1031
      %v1035 = vsel %vm894, %v1033, 0
      %1037 = vmatprep.subr.bf16.mxu0 0
      %1038 = vmatpush1.bf16.msra.mxu0 %v1032
      %1039 = vmatprep.subr.bf16.mxu0 0
      %1040 = vmatpush1.bf16.msra.mxu0 %v1035
      %1041 = vmatprep.subr.bf16.mxu0 0
      %1042 = vmatpush1.bf16.msra.mxu0 0
      %1043 = vmatprep.subr.bf16.mxu0 0
      %1044 = vmatpush1.bf16.msra.mxu0 0
      %1045 = vmatprep.subr.bf16.mxu0 0
      %1046 = vmatpush1.bf16.msra.mxu0 0
      %1047 = vmatprep.subr.bf16.mxu0 0
      %1048 = vmatpush1.bf16.msra.mxu0 0
      %1049 = vmatprep.subr.bf16.mxu0 0
      %1050 = vmatpush1.bf16.msra.mxu0 0
      %1051 = vmatprep.subr.bf16.mxu0 0
      %1052 = vmatpush1.bf16.msra.mxu0 0
      %1053 = vmatprep.subr.bf16.mxu0 0
      %1054 = vmatpush1.bf16.msra.mxu0 0
      %1055 = vmatprep.subr.bf16.mxu0 0
      %1056 = vmatpush1.bf16.msra.mxu0 0
      %1057 = vmatprep.subr.bf16.mxu0 0
      %1058 = vmatpush1.bf16.msra.mxu0 0
      %1059 = vmatprep.subr.bf16.mxu0 0
      %1060 = vmatpush1.bf16.msra.mxu0 0
      %1061 = vmatprep.subr.bf16.mxu0 0
      %1062 = vmatpush1.bf16.msra.mxu0 0
      %1063 = vmatprep.subr.bf16.mxu0 0
      %1064 = vmatpush1.bf16.msra.mxu0 0
      %1065 = vmatprep.subr.bf16.mxu0 0
      %1066 = vmatpush1.bf16.msra.mxu0 0
      %1067 = vmatprep.subr.bf16.mxu0 0
      %1068 = vmatpush1.bf16.msra.mxu0 0
      %1069 = vmatprep.mubr.bf16.mxu0 0
      %1070 = vmatmul.mubr.bf16.gmra.mrb[0].mxu0 %v892
      %v1071 = vpop.f32.mrb[0].mxu0
      %v1072 = vadd.f32 0.0, %v1071
      %v1073 = vpop.f32.mrb[0].mxu0
      %v1074 = vpop.f32.mrb[0].mxu0
      %v1075 = vpop.f32.mrb[0].mxu0
      %1076 = vdwg.mxu0
      %v1077 = vmul.f32 %v1072, %v941
      %v1078 = vadd.f32 %v1077, %v947
      %v1079 = vxor.u32 %v1078, 2147483648
      %v1080 = vmul.f32 %v1079, 1.442695
      %v1081 = vpow.pop %v1080
      %v1082 = vadd.f32 %v1081, 1.0
      %v1083 = vrcp.pop %v1082
      %v1084 = vmul.f32 1.0, %v1083
      %v1085 = vmul.f32 %v1078, %v1084
      %1086 = vst.msk [vmem:[#allocation4 + $0x20] sm:$0xff] %vm957, %v1085
      %vm1087 = vcmask 7168
      %1088 = vst.msk [vmem:[#allocation4] sm:$0xff] %vm1087, 0.0
      %1090 = vrot.lane.b32.xlu0 %v1085, 1
      %v1091 = vpop.permute.xlu0 %1090
      %vm1093 = vcmask 64520
      %1094 = vst.msk [vmem:[#allocation4] sm:$0xff] %vm1093, %v1091
      %vm1095 = vcmask 72768
      %1096 = vst.msk [vmem:[#allocation4] sm:$0xff] %vm1095, 0.0
      %vm1097 = vcmask 130120
      %1098 = vst.msk [vmem:[#allocation4] sm:$0xff] %vm1097, %v1091
      %v1099 = vld [vmem:[#allocation3 + $0x18] sm:$0xff]
      %v1100 = vld [vmem:[#allocation3 + $0x20] sm:$0xff]
      %v1101 = vld [vmem:[#allocation3 + $0x28] sm:$0xf]
      %v1102 = vpack.c.bf16 %v1100, %v1099
      %v1103 = vpack.c.bf16 %v1101, %v1101
      %v1105 = vsel %vm894, %v1103, 0
      %1107 = vmatprep.subr.bf16.mxu0 0
      %1108 = vmatpush1.bf16.msra.mxu0 %v1102
      %1109 = vmatprep.subr.bf16.mxu0 0
      %1110 = vmatpush1.bf16.msra.mxu0 %v1105
      %1111 = vmatprep.subr.bf16.mxu0 0
      %1112 = vmatpush1.bf16.msra.mxu0 0
      %1113 = vmatprep.subr.bf16.mxu0 0
      %1114 = vmatpush1.bf16.msra.mxu0 0
      %1115 = vmatprep.subr.bf16.mxu0 0
      %1116 = vmatpush1.bf16.msra.mxu0 0
      %1117 = vmatprep.subr.bf16.mxu0 0
      %1118 = vmatpush1.bf16.msra.mxu0 0
      %1119 = vmatprep.subr.bf16.mxu0 0
      %1120 = vmatpush1.bf16.msra.mxu0 0
      %1121 = vmatprep.subr.bf16.mxu0 0
      %1122 = vmatpush1.bf16.msra.mxu0 0
      %1123 = vmatprep.subr.bf16.mxu0 0
      %1124 = vmatpush1.bf16.msra.mxu0 0
      %1125 = vmatprep.subr.bf16.mxu0 0
      %1126 = vmatpush1.bf16.msra.mxu0 0
      %1127 = vmatprep.subr.bf16.mxu0 0
      %1128 = vmatpush1.bf16.msra.mxu0 0
      %1129 = vmatprep.subr.bf16.mxu0 0
      %1130 = vmatpush1.bf16.msra.mxu0 0
      %1131 = vmatprep.subr.bf16.mxu0 0
      %1132 = vmatpush1.bf16.msra.mxu0 0
      %1133 = vmatprep.subr.bf16.mxu0 0
      %1134 = vmatpush1.bf16.msra.mxu0 0
      %1135 = vmatprep.subr.bf16.mxu0 0
      %1136 = vmatpush1.bf16.msra.mxu0 0
      %1137 = vmatprep.subr.bf16.mxu0 0
      %1138 = vmatpush1.bf16.msra.mxu0 0
      %1139 = vmatprep.mubr.bf16.mxu0 0
      %1140 = vmatmul.mubr.bf16.gmra.mrb[0].mxu0 %v892
      %v1141 = vpop.f32.mrb[0].mxu0
      %v1142 = vadd.f32 0.0, %v1141
      %v1143 = vpop.f32.mrb[0].mxu0
      %v1144 = vpop.f32.mrb[0].mxu0
      %v1145 = vpop.f32.mrb[0].mxu0
      %1146 = vdwg.mxu0
      %v1147 = vmul.f32 %v1142, %v941
      %v1148 = vadd.f32 %v1147, %v947
      %v1149 = vxor.u32 %v1148, 2147483648
      %v1150 = vmul.f32 %v1149, 1.442695
      %v1151 = vpow.pop %v1150
      %v1152 = vadd.f32 %v1151, 1.0
      %v1153 = vrcp.pop %v1152
      %v1154 = vmul.f32 1.0, %v1153
      %v1155 = vmul.f32 %v1148, %v1154
      %1156 = vst.msk [vmem:[#allocation4 + $0x28] sm:$0xff] %vm957, %v1155
      %1157 = vst.msk [vmem:[#allocation4 + $0x8] sm:$0xff] %vm1087, 0.0
      %1159 = vrot.lane.b32.xlu0 %v1155, 1
      %v1160 = vpop.permute.xlu0 %1159
      %1162 = vst.msk [vmem:[#allocation4 + $0x8] sm:$0xff] %vm1093, %v1160
      %1163 = vst.msk [vmem:[#allocation4 + $0x8] sm:$0xff] %vm1095, 0.0
      %1164 = vst.msk [vmem:[#allocation4 + $0x8] sm:$0xff] %vm1097, %v1160
      %v1165 = vld [vmem:[%s3] sm:$0xf]
      %v1166 = vld [vmem:[%s3 + $0x4] sm:$0xf]
      %v1167 = vld [vmem:[%s7 + $0xc] sm:$0xff]
      %v1168 = vld [vmem:[%s7 + $0x14] sm:$0xff]
      %v1169 = vld [vmem:[%s388 + $0xc] sm:$0xff]
      %v1170 = vld [vmem:[%s388 + $0x14] sm:$0xff]
      %v1171 = vld [vmem:[#allocation4] sm:$0xff]
      %v1172 = vld [vmem:[#allocation4 + $0x8] sm:$0xff]
      %v1173 = vld [vmem:[#allocation4 + $0x10] sm:$0xff]
      %v1174 = vld [vmem:[#allocation4 + $0x18] sm:$0xff]
      %v1175 = vld [vmem:[#allocation4 + $0x20] sm:$0xff]
      %v1176 = vpack.c.bf16 %v1172, %v1171
      %v1177 = vpack.c.bf16 %v1174, %v1173
      %v1178 = vpack.c.bf16 %v1175, %v1175
      %v1181 = vunpack.c.l.b16 %v1165
      %v1182 = vunpack.c.l.b16 %v1166
      %v1183 = vpack.c.b16 %v1182, %v1181
      %vm1184 = vcmask 326656
      %v1186 = vsel %vm1184, %v1183, 0
      %vm1188 = vcmask 1043456
      %v1190 = vsel %vm1188, %v1178, 0
      %1192 = vmatprep.subr.bf16.mxu0 0
      %1193 = vmatpush1.bf16.msra.mxu0 %v1176
      %1194 = vmatprep.subr.bf16.mxu0 0
      %1195 = vmatpush1.bf16.msra.mxu0 %v1177
      %1196 = vmatprep.subr.bf16.mxu0 0
      %1197 = vmatpush1.bf16.msra.mxu0 %v1190
      %1198 = vmatprep.subr.bf16.mxu0 0
      %1199 = vmatpush1.bf16.msra.mxu0 0
      %1200 = vmatprep.subr.bf16.mxu0 0
      %1201 = vmatpush1.bf16.msra.mxu0 0
      %1202 = vmatprep.subr.bf16.mxu0 0
      %1203 = vmatpush1.bf16.msra.mxu0 0
      %1204 = vmatprep.subr.bf16.mxu0 0
      %1205 = vmatpush1.bf16.msra.mxu0 0
      %1206 = vmatprep.subr.bf16.mxu0 0
      %1207 = vmatpush1.bf16.msra.mxu0 0
      %1208 = vmatprep.subr.bf16.mxu0 0
      %1209 = vmatpush1.bf16.msra.mxu0 0
      %1210 = vmatprep.subr.bf16.mxu0 0
      %1211 = vmatpush1.bf16.msra.mxu0 0
      %1212 = vmatprep.subr.bf16.mxu0 0
      %1213 = vmatpush1.bf16.msra.mxu0 0
      %1214 = vmatprep.subr.bf16.mxu0 0
      %1215 = vmatpush1.bf16.msra.mxu0 0
      %1216 = vmatprep.subr.bf16.mxu0 0
      %1217 = vmatpush1.bf16.msra.mxu0 0
      %1218 = vmatprep.subr.bf16.mxu0 0
      %1219 = vmatpush1.bf16.msra.mxu0 0
      %1220 = vmatprep.subr.bf16.mxu0 0
      %1221 = vmatpush1.bf16.msra.mxu0 0
      %1222 = vmatprep.subr.bf16.mxu0 0
      %1223 = vmatpush1.bf16.msra.mxu0 0
      %1224 = vmatprep.mubr.bf16.mxu0 0
      %1225 = vmatmul.mubr.bf16.gmra.mrb[0].mxu0 %v1186
      %v1226 = vpop.f32.mrb[0].mxu0
      %v1227 = vadd.f32 0.0, %v1226
      %v1228 = vpop.f32.mrb[0].mxu0
      %v1229 = vpop.f32.mrb[0].mxu0
      %v1230 = vadd.f32 0.0, %v1229
      %v1231 = vpop.f32.mrb[0].mxu0
      %1232 = vdwg.mxu0
      %1234 = vset.pattern.permute.xlu0 0
      %1235 = vperm.xlu0 %1234, %v1167
      %v1236 = vpop.permute.xlu0 %1235
      %1239 = vset.pattern.permute.xlu0 0
      %1240 = vperm.xlu0 %1239, %v1168
      %v1241 = vpop.permute.xlu0 %1240
      %v1243 = vmul.f32 %v1227, %v1236
      %v1244 = vmul.f32 %v1230, %v1241
      %1246 = vset.pattern.permute.xlu0 0
      %1247 = vperm.xlu0 %1246, %v1169
      %v1248 = vpop.permute.xlu0 %1247
      %1251 = vset.pattern.permute.xlu0 0
      %1252 = vperm.xlu0 %1251, %v1170
      %v1253 = vpop.permute.xlu0 %1252
      %v1255 = vadd.f32 %v1243, %v1248
      %v1256 = vadd.f32 %v1244, %v1253
      %v1257 = vxor.u32 %v1255, 2147483648
      %v1258 = vxor.u32 %v1256, 2147483648
      %v1259 = vmul.f32 %v1257, 1.442695
      %v1260 = vpow.pop %v1259
      %v1261 = vmul.f32 %v1258, 1.442695
      %v1262 = vpow.pop %v1261
      %v1263 = vadd.f32 %v1260, 1.0
      %v1264 = vadd.f32 %v1262, 1.0
      %v1265 = vrcp.pop %v1263
      %v1266 = vmul.f32 1.0, %v1265
      %v1267 = vrcp.pop %v1264
      %v1268 = vmul.f32 1.0, %v1267
      %v1269 = vmul.f32 %v1255, %v1266
      %v1270 = vmul.f32 %v1256, %v1268
      %1271 = vst.msk [vmem:[#allocation5 + $0x20] sm:$0xff] %vm957, %v1269
      %1272 = vst.msk [vmem:[#allocation5 + $0x28] sm:$0xff] %vm957, %v1270
      %1273 = vst.msk [vmem:[#allocation5] sm:$0xff] %vm1087, 0.0
      %1274 = vst.msk [vmem:[#allocation5 + $0x8] sm:$0xff] %vm1087, 0.0
      %1277 = vrot.lane.b32.xlu0 %v1269, 1
      %v1278 = vpop.permute.xlu0 %1277
      %1279 = vrot.lane.b32.xlu0 %v1270, 1
      %v1280 = vpop.permute.xlu0 %1279
      %1283 = vst.msk [vmem:[#allocation5] sm:$0xff] %vm1093, %v1278
      %1284 = vst.msk [vmem:[#allocation5 + $0x8] sm:$0xff] %vm1093, %v1280
      %1285 = vrot.lane.b32.xlu0 %v1269, 127
      %v1286 = vpop.permute.xlu0 %1285
      %1287 = vrot.lane.b32.xlu0 %v1270, 127
      %v1288 = vpop.permute.xlu0 %1287
      %1291 = vst.msk [vmem:[#allocation5 + $0x40] sm:$0xff] %vm963, %v1286
      %1292 = vst.msk [vmem:[#allocation5 + $0x48] sm:$0xff] %vm963, %v1288
      %1293 = vst.msk [vmem:[#allocation5 + $0x40] sm:$0xff] %vm965, 0.0
      %1294 = vst.msk [vmem:[#allocation5 + $0x48] sm:$0xff] %vm965, 0.0
      %1295 = vst.msk [vmem:[#allocation5] sm:$0xff] %vm1095, 0.0
      %1296 = vst.msk [vmem:[#allocation5 + $0x8] sm:$0xff] %vm1095, 0.0
      %1297 = vst.msk [vmem:[#allocation5] sm:$0xff] %vm1097, %v1278
      %1298 = vst.msk [vmem:[#allocation5 + $0x8] sm:$0xff] %vm1097, %v1280
      %1299 = vst.msk [vmem:[#allocation5 + $0x40] sm:$0xff] %vm967, %v1286
      %1300 = vst.msk [vmem:[#allocation5 + $0x48] sm:$0xff] %vm967, %v1288
      %1301 = vst.msk [vmem:[#allocation5 + $0x40] sm:$0xff] %vm969, 0.0
      %1302 = vst.msk [vmem:[#allocation5 + $0x48] sm:$0xff] %vm969, 0.0
      %v1303 = vld [vmem:[#allocation4 + $0x10] sm:$0xff]
      %v1304 = vld [vmem:[#allocation4 + $0x18] sm:$0xff]
      %v1305 = vld [vmem:[#allocation4 + $0x20] sm:$0xff]
      %v1306 = vld [vmem:[#allocation4 + $0x28] sm:$0xff]
      %v1307 = vld [vmem:[#allocation4 + $0x30] sm:$0xff]
      %v1308 = vpack.c.bf16 %v1304, %v1303
      %v1309 = vpack.c.bf16 %v1306, %v1305
      %v1310 = vpack.c.bf16 %v1307, %v1307
      %v1312 = vsel %vm1188, %v1310, 0
      %1314 = vmatprep.subr.bf16.mxu0 0
      %1315 = vmatpush1.bf16.msra.mxu0 %v1308
      %1316 = vmatprep.subr.bf16.mxu0 0
      %1317 = vmatpush1.bf16.msra.mxu0 %v1309
      %1318 = vmatprep.subr.bf16.mxu0 0
      %1319 = vmatpush1.bf16.msra.mxu0 %v1312
      %1320 = vmatprep.subr.bf16.mxu0 0
      %1321 = vmatpush1.bf16.msra.mxu0 0
      %1322 = vmatprep.subr.bf16.mxu0 0
      %1323 = vmatpush1.bf16.msra.mxu0 0
      %1324 = vmatprep.subr.bf16.mxu0 0
      %1325 = vmatpush1.bf16.msra.mxu0 0
      %1326 = vmatprep.subr.bf16.mxu0 0
      %1327 = vmatpush1.bf16.msra.mxu0 0
      %1328 = vmatprep.subr.bf16.mxu0 0
      %1329 = vmatpush1.bf16.msra.mxu0 0
      %1330 = vmatprep.subr.bf16.mxu0 0
      %1331 = vmatpush1.bf16.msra.mxu0 0
      %1332 = vmatprep.subr.bf16.mxu0 0
      %1333 = vmatpush1.bf16.msra.mxu0 0
      %1334 = vmatprep.subr.bf16.mxu0 0
      %1335 = vmatpush1.bf16.msra.mxu0 0
      %1336 = vmatprep.subr.bf16.mxu0 0
      %1337 = vmatpush1.bf16.msra.mxu0 0
      %1338 = vmatprep.subr.bf16.mxu0 0
      %1339 = vmatpush1.bf16.msra.mxu0 0
      %1340 = vmatprep.subr.bf16.mxu0 0
      %1341 = vmatpush1.bf16.msra.mxu0 0
      %1342 = vmatprep.subr.bf16.mxu0 0
      %1343 = vmatpush1.bf16.msra.mxu0 0
      %1344 = vmatprep.subr.bf16.mxu0 0
      %1345 = vmatpush1.bf16.msra.mxu0 0
      %1346 = vmatprep.mubr.bf16.mxu0 0
      %1347 = vmatmul.mubr.bf16.gmra.mrb[0].mxu0 %v1186
      %v1348 = vpop.f32.mrb[0].mxu0
      %v1349 = vadd.f32 0.0, %v1348
      %v1350 = vpop.f32.mrb[0].mxu0
      %v1351 = vpop.f32.mrb[0].mxu0
      %v1352 = vadd.f32 0.0, %v1351
      %v1353 = vpop.f32.mrb[0].mxu0
      %1354 = vdwg.mxu0
      %v1355 = vmul.f32 %v1349, %v1236
      %v1356 = vmul.f32 %v1352, %v1241
      %v1357 = vadd.f32 %v1355, %v1248
      %v1358 = vadd.f32 %v1356, %v1253
      %v1359 = vxor.u32 %v1357, 2147483648
      %v1360 = vxor.u32 %v1358, 2147483648
      %v1361 = vmul.f32 %v1359, 1.442695
      %v1362 = vpow.pop %v1361
      %v1363 = vmul.f32 %v1360, 1.442695
      %v1364 = vpow.pop %v1363
      %v1365 = vadd.f32 %v1362, 1.0
      %v1366 = vadd.f32 %v1364, 1.0
      %v1367 = vrcp.pop %v1365
      %v1368 = vmul.f32 1.0, %v1367
      %v1369 = vrcp.pop %v1366
      %v1370 = vmul.f32 1.0, %v1369
      %v1371 = vmul.f32 %v1357, %v1368
      %v1372 = vmul.f32 %v1358, %v1370
      %1373 = vst.msk [vmem:[#allocation5 + $0x30] sm:$0xff] %vm957, %v1371
      %1374 = vst.msk [vmem:[#allocation5 + $0x38] sm:$0xff] %vm957, %v1372
      %1375 = vst.msk [vmem:[#allocation5 + $0x10] sm:$0xff] %vm1087, 0.0
      %1376 = vst.msk [vmem:[#allocation5 + $0x18] sm:$0xff] %vm1087, 0.0
      %1379 = vrot.lane.b32.xlu0 %v1371, 1
      %v1380 = vpop.permute.xlu0 %1379
      %1381 = vrot.lane.b32.xlu0 %v1372, 1
      %v1382 = vpop.permute.xlu0 %1381
      %1385 = vst.msk [vmem:[#allocation5 + $0x10] sm:$0xff] %vm1093, %v1380
      %1386 = vst.msk [vmem:[#allocation5 + $0x18] sm:$0xff] %vm1093, %v1382
      %1387 = vst.msk [vmem:[#allocation5 + $0x10] sm:$0xff] %vm1095, 0.0
      %1388 = vst.msk [vmem:[#allocation5 + $0x18] sm:$0xff] %vm1095, 0.0
      %1389 = vst.msk [vmem:[#allocation5 + $0x10] sm:$0xff] %vm1097, %v1380
      %1390 = vst.msk [vmem:[#allocation5 + $0x18] sm:$0xff] %vm1097, %v1382
      %v1391 = vld [vmem:[%s4] sm:$0xf]
      %v1392 = vld [vmem:[%s4 + $0x4] sm:$0xf]
      %v1393 = vld [vmem:[%s4 + $0x8] sm:$0xf]
      %v1394 = vld [vmem:[%s4 + $0xc] sm:$0xf]
      %v1395 = vld [vmem:[%s7 + $0x1c] sm:$0xff]
      %v1396 = vld [vmem:[%s7 + $0x24] sm:$0xff]
      %v1397 = vld [vmem:[%s7 + $0x2c] sm:$0xff]
      %v1398 = vld [vmem:[%s7 + $0x34] sm:$0xff]
      %v1399 = vld [vmem:[%s388 + $0x1c] sm:$0xff]
      %v1400 = vld [vmem:[%s388 + $0x24] sm:$0xff]
      %v1401 = vld [vmem:[%s388 + $0x2c] sm:$0xff]
      %v1402 = vld [vmem:[%s388 + $0x34] sm:$0xff]
      %v1403 = vld [vmem:[#allocation5] sm:$0xff]
      %v1404 = vld [vmem:[#allocation5 + $0x8] sm:$0xff]
      %v1405 = vld [vmem:[#allocation5 + $0x10] sm:$0xff]
      %v1406 = vld [vmem:[#allocation5 + $0x18] sm:$0xff]
      %v1407 = vld [vmem:[#allocation5 + $0x20] sm:$0xff]
      %v1408 = vld [vmem:[#allocation5 + $0x28] sm:$0xff]
      %v1409 = vld [vmem:[#allocation5 + $0x30] sm:$0xff]
      %v1410 = vld [vmem:[#allocation5 + $0x38] sm:$0xff]
      %v1411 = vld [vmem:[#allocation5 + $0x40] sm:$0xff]
      %v1412 = vld [vmem:[#allocation5 + $0x48] sm:$0xff]
      %v1413 = vpack.c.bf16 %v1404, %v1403
      %v1414 = vpack.c.bf16 %v1406, %v1405
      %v1415 = vpack.c.bf16 %v1408, %v1407
      %v1416 = vpack.c.bf16 %v1410, %v1409
      %v1417 = vpack.c.bf16 %v1412, %v1411
      %v1422 = vunpack.c.l.b16 %v1391
      %v1423 = vunpack.c.l.b16 %v1392
      %v1424 = vunpack.c.l.b16 %v1393
      %v1425 = vunpack.c.l.b16 %v1394
      %v1426 = vpack.c.b16 %v1423, %v1422
      %v1427 = vpack.c.b16 %v1425, %v1424
      %vm1428 = vcmask 654336
      %v1430 = vsel %vm1428, %v1426, 0
      %v1433 = vsel %vm1428, %v1427, 0
      %1435 = vmatprep.subr.bf16.mxu0 0
      %1436 = vmatpush1.bf16.msra.mxu0 %v1413
      %1437 = vmatprep.subr.bf16.mxu0 0
      %1438 = vmatpush1.bf16.msra.mxu0 %v1414
      %1439 = vmatprep.subr.bf16.mxu0 0
      %1440 = vmatpush1.bf16.msra.mxu0 %v1415
      %1441 = vmatprep.subr.bf16.mxu0 0
      %1442 = vmatpush1.bf16.msra.mxu0 %v1416
      %1443 = vmatprep.subr.bf16.mxu0 0
      %1444 = vmatpush1.bf16.msra.mxu0 %v1417
      %1445 = vmatprep.subr.bf16.mxu0 0
      %1446 = vmatpush1.bf16.msra.mxu0 0
      %1447 = vmatprep.subr.bf16.mxu0 0
      %1448 = vmatpush1.bf16.msra.mxu0 0
      %1449 = vmatprep.subr.bf16.mxu0 0
      %1450 = vmatpush1.bf16.msra.mxu0 0
      %1451 = vmatprep.subr.bf16.mxu0 0
      %1452 = vmatpush1.bf16.msra.mxu0 0
      %1453 = vmatprep.subr.bf16.mxu0 0
      %1454 = vmatpush1.bf16.msra.mxu0 0
      %1455 = vmatprep.subr.bf16.mxu0 0
      %1456 = vmatpush1.bf16.msra.mxu0 0
      %1457 = vmatprep.subr.bf16.mxu0 0
      %1458 = vmatpush1.bf16.msra.mxu0 0
      %1459 = vmatprep.subr.bf16.mxu0 0
      %1460 = vmatpush1.bf16.msra.mxu0 0
      %1461 = vmatprep.subr.bf16.mxu0 0
      %1462 = vmatpush1.bf16.msra.mxu0 0
      %1463 = vmatprep.subr.bf16.mxu0 0
      %1464 = vmatpush1.bf16.msra.mxu0 0
      %1465 = vmatprep.subr.bf16.mxu0 0
      %1466 = vmatpush1.bf16.msra.mxu0 0
      %1467 = vmatprep.mubr.bf16.mxu0 0
      %1468 = vmatmul.mubr.bf16.gmra.mrb[0].mxu0 %v1430
      %v1469 = vpop.f32.mrb[0].mxu0
      %v1470 = vadd.f32 0.0, %v1469
      %v1471 = vpop.f32.mrb[0].mxu0
      %v1472 = vpop.f32.mrb[0].mxu0
      %v1473 = vadd.f32 0.0, %v1472
      %v1474 = vpop.f32.mrb[0].mxu0
      %1475 = vmatprep.mubr.bf16.mxu0 0
      %1476 = vmatmul.mubr.bf16.gmra.mrb[0].mxu0 %v1433
      %v1477 = vpop.f32.mrb[0].mxu0
      %v1478 = vadd.f32 0.0, %v1477
      %v1479 = vpop.f32.mrb[0].mxu0
      %v1480 = vpop.f32.mrb[0].mxu0
      %v1481 = vadd.f32 0.0, %v1480
      %v1482 = vpop.f32.mrb[0].mxu0
      %1483 = vdwg.mxu0
      %1485 = vset.pattern.permute.xlu0 0
      %1486 = vperm.xlu0 %1485, %v1395
      %v1487 = vpop.permute.xlu0 %1486
      %1490 = vset.pattern.permute.xlu0 0
      %1491 = vperm.xlu0 %1490, %v1396
      %v1492 = vpop.permute.xlu0 %1491
      %1495 = vset.pattern.permute.xlu0 0
      %1496 = vperm.xlu0 %1495, %v1397
      %v1497 = vpop.permute.xlu0 %1496
      %1500 = vset.pattern.permute.xlu0 0
      %1501 = vperm.xlu0 %1500, %v1398
      %v1502 = vpop.permute.xlu0 %1501
      %v1504 = vmul.f32 %v1470, %v1487
      %v1505 = vmul.f32 %v1473, %v1492
      %v1506 = vmul.f32 %v1478, %v1497
      %v1507 = vmul.f32 %v1481, %v1502
      %1509 = vset.pattern.permute.xlu0 0
      %1510 = vperm.xlu0 %1509, %v1399
      %v1511 = vpop.permute.xlu0 %1510
      %1514 = vset.pattern.permute.xlu0 0
      %1515 = vperm.xlu0 %1514, %v1400
      %v1516 = vpop.permute.xlu0 %1515
      %1519 = vset.pattern.permute.xlu0 0
      %1520 = vperm.xlu0 %1519, %v1401
      %v1521 = vpop.permute.xlu0 %1520
      %1524 = vset.pattern.permute.xlu0 0
      %1525 = vperm.xlu0 %1524, %v1402
      %v1526 = vpop.permute.xlu0 %1525
      %v1528 = vadd.f32 %v1504, %v1511
      %v1529 = vadd.f32 %v1505, %v1516
      %v1530 = vadd.f32 %v1506, %v1521
      %v1531 = vadd.f32 %v1507, %v1526
      %v1532 = vxor.u32 %v1528, 2147483648
      %v1533 = vxor.u32 %v1529, 2147483648
      %v1534 = vxor.u32 %v1530, 2147483648
      %v1535 = vxor.u32 %v1531, 2147483648
      %v1536 = vmul.f32 %v1532, 1.442695
      %v1537 = vpow.pop %v1536
      %v1538 = vmul.f32 %v1533, 1.442695
      %v1539 = vpow.pop %v1538
      %v1540 = vmul.f32 %v1534, 1.442695
      %v1541 = vpow.pop %v1540
      %v1542 = vmul.f32 %v1535, 1.442695
      %v1543 = vpow.pop %v1542
      %v1544 = vadd.f32 %v1537, 1.0
      %v1545 = vadd.f32 %v1539, 1.0
      %v1546 = vadd.f32 %v1541, 1.0
      %v1547 = vadd.f32 %v1543, 1.0
      %v1548 = vrcp.pop %v1544
      %v1549 = vmul.f32 1.0, %v1548
      %v1550 = vrcp.pop %v1545
      %v1551 = vmul.f32 1.0, %v1550
      %v1552 = vrcp.pop %v1546
      %v1553 = vmul.f32 1.0, %v1552
      %v1554 = vrcp.pop %v1547
      %v1555 = vmul.f32 1.0, %v1554
      %v1556 = vmul.f32 %v1528, %v1549
      %v1557 = vmul.f32 %v1529, %v1551
      %v1558 = vmul.f32 %v1530, %v1553
      %v1559 = vmul.f32 %v1531, %v1555
      %v1560 = vld [vmem:[%s5] sm:$0xf]
      %v1561 = vld [vmem:[%s5 + $0x4] sm:$0xf]
      %v1562 = vld [vmem:[%s5 + $0x8] sm:$0xf]
      %v1563 = vld [vmem:[%s5 + $0xc] sm:$0xf]
      %v1564 = vpack.c.bf16 %v1557, %v1556
      %v1565 = vpack.c.bf16 %v1559, %v1558
      %v1566 = vld [vmem:[%s6] sm:$0xff]
      %v1567 = vld [vmem:[%s6 + $0x8] sm:$0xff]
      %v1568 = vld [vmem:[%s6 + $0x10] sm:$0xff]
      %v1569 = vld [vmem:[%s6 + $0x18] sm:$0xff]
      %1571 = vset.pattern.permute.xlu0 0
      %1572 = vperm.xlu0 %1571, %v1566
      %v1573 = vpop.permute.xlu0 %1572
      %1576 = vset.pattern.permute.xlu0 0
      %1577 = vperm.xlu0 %1576, %v1567
      %v1578 = vpop.permute.xlu0 %1577
      %1581 = vset.pattern.permute.xlu0 0
      %1582 = vperm.xlu0 %1581, %v1568
      %v1583 = vpop.permute.xlu0 %1582
      %1586 = vset.pattern.permute.xlu0 0
      %1587 = vperm.xlu0 %1586, %v1569
      %v1588 = vpop.permute.xlu0 %1587
      %v1594 = vunpack.c.l.b16 %v1560
      %v1595 = vunpack.c.l.b16 %v1561
      %v1596 = vunpack.c.l.b16 %v1562
      %v1597 = vunpack.c.l.b16 %v1563
      %v1598 = vpack.c.b16 %v1595, %v1594
      %v1599 = vpack.c.b16 %v1597, %v1596
      %vm1600 = vcmask 261120
      %v1602 = vsel %vm1600, %v1598, 0
      %v1605 = vsel %vm1600, %v1599, 0
      %1607 = vmatprep.subr.bf16.mxu0 0
      %1608 = vmatpush1.bf16.msra.mxu0 %v1564
      %1609 = vmatprep.subr.bf16.mxu0 0
      %1610 = vmatpush1.bf16.msra.mxu0 %v1565
      %1611 = vmatprep.subr.bf16.mxu0 0
      %1612 = vmatpush1.bf16.msra.mxu0 0
      %1613 = vmatprep.subr.bf16.mxu0 0
      %1614 = vmatpush1.bf16.msra.mxu0 0
      %1615 = vmatprep.subr.bf16.mxu0 0
      %1616 = vmatpush1.bf16.msra.mxu0 0
      %1617 = vmatprep.subr.bf16.mxu0 0
      %1618 = vmatpush1.bf16.msra.mxu0 0
      %1619 = vmatprep.subr.bf16.mxu0 0
      %1620 = vmatpush1.bf16.msra.mxu0 0
      %1621 = vmatprep.subr.bf16.mxu0 0
      %1622 = vmatpush1.bf16.msra.mxu0 0
      %1623 = vmatprep.subr.bf16.mxu0 0
      %1624 = vmatpush1.bf16.msra.mxu0 0
      %1625 = vmatprep.subr.bf16.mxu0 0
      %1626 = vmatpush1.bf16.msra.mxu0 0
      %1627 = vmatprep.subr.bf16.mxu0 0
      %1628 = vmatpush1.bf16.msra.mxu0 0
      %1629 = vmatprep.subr.bf16.mxu0 0
      %1630 = vmatpush1.bf16.msra.mxu0 0
      %1631 = vmatprep.subr.bf16.mxu0 0
      %1632 = vmatpush1.bf16.msra.mxu0 0
      %1633 = vmatprep.subr.bf16.mxu0 0
      %1634 = vmatpush1.bf16.msra.mxu0 0
      %1635 = vmatprep.subr.bf16.mxu0 0
      %1636 = vmatpush1.bf16.msra.mxu0 0
      %1637 = vmatprep.subr.bf16.mxu0 0
      %1638 = vmatpush1.bf16.msra.mxu0 0
      %1639 = vmatprep.mubr.bf16.mxu0 0
      %1640 = vmatmul.mubr.bf16.gmra.mrb[0].mxu0 %v1602
      %v1641 = vpop.f32.mrb[0].mxu0
      %v1642 = vadd.f32 %v1573, %v1641
      %v1643 = vpop.f32.mrb[0].mxu0
      %v1644 = vpop.f32.mrb[0].mxu0
      %v1645 = vadd.f32 %v1578, %v1644
      %v1646 = vpop.f32.mrb[0].mxu0
      %1647 = vmatprep.mubr.bf16.mxu0 0
      %1648 = vmatmul.mubr.bf16.gmra.mrb[0].mxu0 %v1605
      %v1649 = vpop.f32.mrb[0].mxu0
      %v1650 = vadd.f32 %v1583, %v1649
      %v1651 = vpop.f32.mrb[0].mxu0
      %v1652 = vpop.f32.mrb[0].mxu0
      %v1653 = vadd.f32 %v1588, %v1652
      %v1654 = vpop.f32.mrb[0].mxu0
      %1655 = vdwg.mxu0
      %1656 = vst.msk [vmem:[%s312] sm:$0xff] %vm319, %v1642
      %1657 = vst.msk [vmem:[%s312 + $0x8] sm:$0xff] %vm319, %v1645
      %1658 = vst.msk [vmem:[%s312 + $0x10] sm:$0xff] %vm319, %v1650
      %1659 = vst.msk [vmem:[%s312 + $0x18] sm:$0xff] %vm319, %v1653
      %1664 = vrot.lane.b32.xlu0 %v1642, 120
      %v1665 = vpop.permute.xlu0 %1664
      %1666 = vrot.lane.b32.xlu0 %v1645, 120
      %v1667 = vpop.permute.xlu0 %1666
      %1668 = vrot.lane.b32.xlu0 %v1650, 120
      %v1669 = vpop.permute.xlu0 %1668
      %1670 = vrot.lane.b32.xlu0 %v1653, 120
      %v1671 = vpop.permute.xlu0 %1670
      %s1676 = scalar_lea.vmem %s312, 32
      %1677 = vst.msk [vmem:[%s1676] sm:$0xff] %vm319, %v1665
      %1678 = vst.msk [vmem:[%s1676 + $0x8] sm:$0xff] %vm319, %v1667
      %1679 = vst.msk [vmem:[%s1676 + $0x10] sm:$0xff] %vm319, %v1669
      %1680 = vst.msk [vmem:[%s1676 + $0x18] sm:$0xff] %vm319, %v1671
      %s1681 = smul.u32 2, %s19
      %p1682 = scmp.lt.s32.totalorder %s1681, 7
      %s1683 = scalar_select %p1682, %s1681, 7
      %s1684 = smul.addr %s1683, 4
      %s1685 = smul.addr %s1684, 8
      %s1686 = scalar_lea.vmem %s8, %s1685
      // Predicated region
      $region53: #{conv_down_sampler_forward.1} parent=51 // pred_check
        %p1687 = pneg %p210
      $region54: #{conv_down_sampler_forward.1} parent=51 // pred_check_branch
        %1689 = sbr.rel (%p1687) target = $region56
      $region55: #{conv_down_sampler_forward.1} parent=51 // pred_region
        %s1690 = smul.u32 2, %s19
      $region56: #{conv_down_sampler_forward.1} parent=51 // pred_fallthru
        _
    $region52: #{conv_down_sampler_forward.1} parent=5 // pred_fallthru
      _
    %p1691 = scmp.le.s32.totalorder 2, %s14
    // Predicated region
    $region57: #{conv_down_sampler_forward.1} parent=5 // pred_check
      %p1692 = pneg %p1691
    $region58: #{conv_down_sampler_forward.1} parent=5 // pred_check_branch
      %1694 = sbr.rel (%p1692) target = $region60
    $region59: #{conv_down_sampler_forward.1} parent=5 // pred_region
      %s1695 = ssub.s32 %s14, 2
      // Predicated region
      $region61: #{conv_down_sampler_forward.1} parent=59 // pred_check
        %p1696 = pneg %p216
      $region62: #{conv_down_sampler_forward.1} parent=59 // pred_check_branch
        %1698 = sbr.rel (%p1696) target = $region64
      $region63: #{conv_down_sampler_forward.1} parent=59 // pred_region
        %s1699 = smul.u32 2, %s20
        %p1700 = scmp.lt.s32.totalorder %s1699, 7
        %s1701 = scalar_select %p1700, %s1699, 7
        %s1702 = smul.addr %s1701, 4
        %s1703 = smul.addr %s1702, 8
        %s1704 = scalar_lea.vmem %s8, %s1703
      $region64: #{conv_down_sampler_forward.1} parent=59 // pred_fallthru
        _
    $region60: #{conv_down_sampler_forward.1} parent=5 // pred_fallthru
      _
  $region6: #{conv_down_sampler_forward.1} parent=0 // loop_footer
    %s18 = sadd.s32 1, %s14
  $region7: #{conv_down_sampler_forward.1} parent=0 // loop_footer_branch
    %13 = sbr.rel target = $region3
  $region8: #{conv_down_sampler_forward.1} parent=0 // loop_exit
    _

</llo_original>
